<compile_context>
chip_gen: v6e
topology: v6e:2x2x1
jax: 0.10.0
libtpu: 0.0.40
codegen_flags: <defaults>
</compile_context>

<pallas_src>
import functools
import math

import jax
import jax.numpy as jnp
from jax.experimental import pallas as pl
from jax.experimental.pallas import tpu as pltpu


# ----------------------------- small helpers --------------------------------

def _layernorm(x, gamma, beta, eps=1e-5):
    mean = jnp.mean(x, axis=-1, keepdims=True)
    var = jnp.mean((x - mean) ** 2, axis=-1, keepdims=True)
    return (x - mean) * jax.lax.rsqrt(var + eps) * gamma + beta


def _gelu_exact(x):
    # PyTorch nn.GELU() default = exact erf formulation.
    return 0.5 * x * (1.0 + jax.lax.erf(x / jnp.sqrt(2.0).astype(x.dtype)))


def _bytes(shape, dtype):
    return math.prod(shape) * jnp.dtype(dtype).itemsize


def _vmem_limit(block_bytes, scratch_bytes=0):
    # BlockSpec inputs/outputs are double-buffered; add headroom and clamp to a
    # range safe on v5e/v6e (128 MiB phys) and v7x (64 MiB phys).
    est = 2 * block_bytes + scratch_bytes
    return int(min(max(2 * est, 32 * 2 ** 20), 64 * 2 ** 20))


# ------------------------------- kernels -------------------------------------

def qkv_proj_kernel(x_ref, wqkv_ref, bqkv_ref, q_ref, k_ref, v_ref, *, embed_dim):
    E = embed_dim
    x = x_ref[0].astype(jnp.bfloat16)                                   # (tm, E)
    qkv = jnp.dot(x, wqkv_ref[...],                                     # (E, 3E) bf16, pre-transposed
                  preferred_element_type=jnp.float32) + bqkv_ref[0]     # (tm, 3E) f32
    q_ref[0] = qkv[:, 0 * E:1 * E].astype(jnp.bfloat16)
    k_ref[0] = qkv[:, 1 * E:2 * E].astype(jnp.bfloat16)
    v_ref[0] = qkv[:, 2 * E:3 * E].astype(jnp.bfloat16)


def attn_block_kernel(
    x_ref, q_ref, k_ref, v_ref,
    wo3_ref, bo_ref, g1_ref, b1_ref,
    wff1_ref, bff1_ref, wff2_ref, bff2_ref, g2_ref, b2_ref,
    o_ref, m_sc, l_sc, acc_sc, *, head_dim,
):
    kk = pl.program_id(2)

    @pl.when(kk == 0)
    def _init():
        m_sc[...] = jnp.full(m_sc.shape, -jnp.inf, jnp.float32)
        l_sc[...] = jnp.zeros(l_sc.shape, jnp.float32)
        acc_sc[...] = jnp.zeros(acc_sc.shape, jnp.float32)

    q = q_ref[0]                       # (H, tq, Dh) bf16, head-major, no in-kernel transpose
    k = k_ref[0]                       # (H, tk, Dh) bf16
    v = v_ref[0]                       # (H, tk, Dh) bf16

    # Batched-over-heads scores on the MXU, f32 accumulation.
    s = jnp.einsum("hqd,hkd->hqk", q, k, preferred_element_type=jnp.float32)
    s = s * (1.0 / math.sqrt(head_dim))                                 # (H, tq, tk) f32

    # Online softmax (flash-style) over key tiles.
    m_prev = m_sc[...]
    m_new = jnp.maximum(m_prev, jnp.max(s, axis=-1, keepdims=True))
    alpha = jnp.exp(m_prev - m_new)
    p = jnp.exp(s - m_new)
    l_sc[...] = alpha * l_sc[...] + jnp.sum(p, axis=-1, keepdims=True)
    acc_sc[...] = alpha * acc_sc[...] + jnp.einsum(
        "hqk,hkd->hqd", p.astype(v.dtype), v, preferred_element_type=jnp.float32)
    m_sc[...] = m_new

    @pl.when(kk == pl.num_programs(2) - 1)
    def _finalize():
        attn = acc_sc[...] * pl.reciprocal(l_sc[...], approx=True)      # (H, tq, Dh) f32
        # Output projection with per-head weight slabs (H, Dh, E); summing over the
        # head (major) axis replaces the concat + (E,E) matmul without any transpose.
        per_head = jnp.einsum("hqd,hde->hqe", attn.astype(jnp.bfloat16), wo3_ref[...],
                              preferred_element_type=jnp.float32)       # (H, tq, E)
        attn_out = jnp.sum(per_head, axis=0) + bo_ref[0]                # (tq, E)

        x = x_ref[0]                                                    # (tq, E) f32
        x1 = _layernorm(x + attn_out, g1_ref[0], b1_ref[0])

        h = jnp.dot(x1.astype(jnp.bfloat16), wff1_ref[...],
                    preferred_element_type=jnp.float32) + bff1_ref[0]
        h = _gelu_exact(h)
        h = jnp.dot(h.astype(jnp.bfloat16), wff2_ref[...],
                    preferred_element_type=jnp.float32) + bff2_ref[0]

        o_ref[0] = _layernorm(x1 + h, g2_ref[0], b2_ref[0]).astype(o_ref.dtype)


def classifier_head_kernel(x_ref, g_ref, b_ref, wc_ref, bc_ref, o_ref):
    x = _layernorm(x_ref[...], g_ref[0], b_ref[0])                      # (B, E) f32
    o_ref[...] = (jnp.dot(x.astype(jnp.bfloat16), wc_ref[...],
                          preferred_element_type=jnp.float32)
                  + bc_ref[0]).astype(o_ref.dtype)


# ------------------------------- wrappers -------------------------------------

def transformer_block(x, blk, *, n_heads):
    B, S, E = x.shape
    H = n_heads
    Dh = E // H
    tile = S if S <= 256 else 256
    assert S % tile == 0, "sequence length must be divisible by the row tile"
    tq = tk = tile
    nq = nk = S // tile

    # ---- QKV projection ----
    qkv_block_bytes = (_bytes((1, tq, E), jnp.float32)
                       + 3 * _bytes((1, tq, E), jnp.bfloat16)
                       + blk["wqkv_t"].size * blk["wqkv_t"].dtype.itemsize
                       + blk["bqkv"].size * blk["bqkv"].dtype.itemsize)
    q, k, v = pl.pallas_call(
        functools.partial(qkv_proj_kernel, embed_dim=E),
        grid=(B, nq),
        in_specs=[
            pl.BlockSpec((1, tq, E), lambda b, i: (b, i, 0)),
            pl.BlockSpec((E, 3 * E), lambda b, i: (0, 0)),
            pl.BlockSpec((1, 3 * E), lambda b, i: (0, 0)),
        ],
        out_specs=[pl.BlockSpec((1, tq, E), lambda b, i: (b, i, 0))] * 3,
        out_shape=[jax.ShapeDtypeStruct((B, S, E), jnp.bfloat16)] * 3,
        compiler_params=pltpu.CompilerParams(
            dimension_semantics=("parallel", "parallel"),
            vmem_limit_bytes=_vmem_limit(qkv_block_bytes)),
    )(x, blk["wqkv_t"], blk["bqkv"])

    # Head-major layout (B, H, S, Dh) produced in the wrapper (cheap XLA relayout)
    # so the attention kernel needs no in-kernel reshapes/transposes.
    def to_heads(t):
        return t.reshape(B, S, H, Dh).transpose(0, 2, 1, 3)

    qh, kh, vh = to_heads(q), to_heads(k), to_heads(v)

    def rep(arr):  # resident (constant index) full-array weight block
        return pl.BlockSpec(arr.shape, lambda b, i, j: (0,) * arr.ndim)

    w_names = ("wo3", "bo", "g1", "b1", "wff1_t", "bff1", "wff2_t", "bff2", "g2", "b2")
    attn_block_bytes = (2 * _bytes((1, tq, E), jnp.float32)
                        + _bytes((1, H, tq, Dh), jnp.bfloat16)
                        + 2 * _bytes((1, H, tk, Dh), jnp.bfloat16)
                        + sum(blk[n].size * blk[n].dtype.itemsize for n in w_names))
    attn_scratch_bytes = (2 * _bytes((H, tq, 1), jnp.float32)
                          + _bytes((H, tq, Dh), jnp.float32))

    out = pl.pallas_call(
        functools.partial(attn_block_kernel, head_dim=Dh),
        grid=(B, nq, nk),
        in_specs=[
            pl.BlockSpec((1, tq, E), lambda b, i, j: (b, i, 0)),          # x (residual)
            pl.BlockSpec((1, H, tq, Dh), lambda b, i, j: (b, 0, i, 0)),   # q heads
            pl.BlockSpec((1, H, tk, Dh), lambda b, i, j: (b, 0, j, 0)),   # k heads
            pl.BlockSpec((1, H, tk, Dh), lambda b, i, j: (b, 0, j, 0)),   # v heads
            rep(blk["wo3"]), rep(blk["bo"]), rep(blk["g1"]), rep(blk["b1"]),
            rep(blk["wff1_t"]), rep(blk["bff1"]), rep(blk["wff2_t"]), rep(blk["bff2"]),
            rep(blk["g2"]), rep(blk["b2"]),
        ],
        out_specs=pl.BlockSpec((1, tq, E), lambda b, i, j: (b, i, 0)),
        out_shape=jax.ShapeDtypeStruct((B, S, E), jnp.float32),
        scratch_shapes=[
            pltpu.VMEM((H, tq, 1), jnp.float32),    # running max
            pltpu.VMEM((H, tq, 1), jnp.float32),    # running denom
            pltpu.VMEM((H, tq, Dh), jnp.float32),   # output accumulator
        ],
        compiler_params=pltpu.CompilerParams(
            dimension_semantics=("parallel", "parallel", "arbitrary"),
            vmem_limit_bytes=_vmem_limit(attn_block_bytes, attn_scratch_bytes)),
    )(x, qh, kh, vh, blk["wo3"], blk["bo"], blk["g1"], blk["b1"],
      blk["wff1_t"], blk["bff1"], blk["wff2_t"], blk["bff2"], blk["g2"], blk["b2"])
    return out


def classifier_head(x_last, g, b, wc_t, bc):
    B, E = x_last.shape
    L = wc_t.shape[1]
    return pl.pallas_call(
        classifier_head_kernel,
        grid=(1,),
        in_specs=[
            pl.BlockSpec((B, E), lambda i: (0, 0)),
            pl.BlockSpec((1, E), lambda i: (0, 0)),
            pl.BlockSpec((1, E), lambda i: (0, 0)),
            pl.BlockSpec((E, L), lambda i: (0, 0)),
            pl.BlockSpec((1, L), lambda i: (0, 0)),
        ],
        out_specs=pl.BlockSpec((B, L), lambda i: (0, 0)),
        out_shape=jax.ShapeDtypeStruct((B, L), jnp.float32),
    )(x_last, g, b, wc_t, bc)


def nanogpt_classifier(input_ids, packed, *, n_heads):
    B, T = input_ids.shape
    x = (jnp.take(packed["token_embed"], input_ids, axis=0)
         + packed["pos_embed"][None, :T, :])
    for blk in packed["blocks"]:
        x = transformer_block(x, blk, n_heads=n_heads)
    x_last = x[:, -1, :]   # final LayerNorm applied to the last token only (equivalent)
    return classifier_head(x_last, packed["norm_g"], packed["norm_b"],
                           packed["wc_t"], packed["bc"])


# ------------------------------- parameters -----------------------------------

def init_raw_params(key, *, vocab_size, embed_dim, max_length, n_layers, num_labels):
    """PyTorch-layout f32 parameters (used by the pure-JAX reference)."""
    E = embed_dim
    keys = iter(jax.random.split(key, 3 + 5 * n_layers))

    def nrm(k, shape):
        return 0.02 * jax.random.normal(k, shape, jnp.float32)

    params = {
        "token_embed": nrm(next(keys), (vocab_size, E)),
        "pos_embed": nrm(next(keys), (max_length, E)),
        "blocks": [],
        "norm_g": jnp.ones((E,), jnp.float32),
        "norm_b": jnp.zeros((E,), jnp.float32),
        "wc": nrm(next(keys), (num_labels, E)),
        "bc": jnp.zeros((num_labels,), jnp.float32),
    }
    for _ in range(n_layers):
        params["blocks"].append({
            "w_in": nrm(next(keys), (3 * E, E)),
            "b_in": nrm(next(keys), (3 * E,)),
            "w_out": nrm(next(keys), (E, E)),
            "b_out": jnp.zeros((E,), jnp.float32),
            "g1": jnp.ones((E,), jnp.float32), "b1": jnp.zeros((E,), jnp.float32),
            "w_ff1": nrm(next(keys), (4 * E, E)),
            "b_ff1": jnp.zeros((4 * E,), jnp.float32),
            "w_ff2": nrm(next(keys), (E, 4 * E)),
            "b_ff2": jnp.zeros((E,), jnp.float32),
            "g2": jnp.ones((E,), jnp.float32), "b2": jnp.zeros((E,), jnp.float32),
        })
    return params


def pack_params(raw, *, n_heads):
    """Kernel-layout params: pre-transposed, matmul weights pre-cast to bf16."""
    E = raw["norm_g"].shape[0]
    H = n_heads
    Dh = E // H
    bf = jnp.bfloat16

    def row(v):
        return v.reshape(1, -1)

    packed = {
        "token_embed": raw["token_embed"],
        "pos_embed": raw["pos_embed"],
        "blocks": [],
        "norm_g": row(raw["norm_g"]), "norm_b": row(raw["norm_b"]),
        "wc_t": raw["wc"].T.astype(bf),                       # (E, num_labels)
        "bc": row(raw["bc"]),
    }
    for blk in raw["blocks"]:
        packed["blocks"].append({
            "wqkv_t": blk["w_in"].T.astype(bf),               # (E, 3E)
            "bqkv": row(blk["b_in"]),
            "wo3": blk["w_out"].T.reshape(H, Dh, E).astype(bf),  # per-head out-proj slabs
            "bo": row(blk["b_out"]),
            "g1": row(blk["g1"]), "b1": row(blk["b1"]),
            "wff1_t": blk["w_ff1"].T.astype(bf),              # (E, 4E)
            "bff1": row(blk["b_ff1"]),
            "wff2_t": blk["w_ff2"].T.astype(bf),              # (4E, E)
            "bff2": row(blk["b_ff2"]),
            "g2": row(blk["g2"]), "b2": row(blk["b2"]),
        })
    return packed


# ------------------------------ pure-JAX reference ----------------------------

def _ln_ref(x, g, b, eps=1e-5):
    m = jnp.mean(x, axis=-1, keepdims=True)
    v = jnp.mean((x - m) ** 2, axis=-1, keepdims=True)
    return (x - m) / jnp.sqrt(v + eps) * g + b


def reference_block(x, blk, *, n_heads):
    B, S, E = x.shape
    H = n_heads
    Dh = E // H
    qkv = x @ blk["w_in"].T + blk["b_in"]
    q, k, v = qkv[..., :E], qkv[..., E:2 * E], qkv[..., 2 * E:]
    q = q.reshape(B, S, H, Dh).transpose(0, 2, 1, 3) / math.sqrt(Dh)
    k = k.reshape(B, S, H, Dh).transpose(0, 2, 1, 3)
    v = v.reshape(B, S, H, Dh).transpose(0, 2, 1, 3)
    p = jax.nn.softmax(jnp.einsum("bhqd,bhkd->bhqk", q, k), axis=-1)
    a = jnp.einsum("bhqk,bhkd->bhqd", p, v).transpose(0, 2, 1, 3).reshape(B, S, E)
    a = a @ blk["w_out"].T + blk["b_out"]
    x1 = _ln_ref(x + a, blk["g1"], blk["b1"])
    h = x1 @ blk["w_ff1"].T + blk["b_ff1"]
    h = 0.5 * h * (1.0 + jax.lax.erf(h / jnp.sqrt(2.0)))
    h = h @ blk["w_ff2"].T + blk["b_ff2"]
    return _ln_ref(x1 + h, blk["g2"], blk["b2"])


def reference_classifier(input_ids, p, *, n_heads):
    B, T = input_ids.shape
    x = p["token_embed"][input_ids] + p["pos_embed"][:T][None]
    for blk in p["blocks"]:
        x = reference_block(x, blk, n_heads=n_heads)
    x = _ln_ref(x, p["norm_g"], p["norm_b"])
    x = x[:, -1, :]
    return x @ p["wc"].T + p["bc"]


# --------------------------------- demo ---------------------------------------

if __name__ == "__main__":
    VOCAB, E, MAX_LEN, HEADS, LAYERS, LABELS = 64, 32, 16, 4, 2, 2
    B, T = 2, 8

    key = jax.random.PRNGKey(0)
    k_ids, k_par = jax.random.split(key)
    input_ids = jax.random.randint(k_ids, (B, T), 0, VOCAB, dtype=jnp.int32)

    raw = init_raw_params(k_par, vocab_size=VOCAB, embed_dim=E, max_length=MAX_LEN,
                          n_layers=LAYERS, num_labels=LABELS)
    packed = pack_params(raw, n_heads=HEADS)

    forward = jax.jit(functools.partial(nanogpt_classifier, n_heads=HEADS))
    logits = forward(input_ids, packed)
    logits = jax.block_until_ready(logits)

    ref = reference_classifier(input_ids, raw, n_heads=HEADS)
    assert logits.shape == (B, LABELS)
    max_err = float(jnp.max(jnp.abs(logits - ref)))
    # Looser tolerance than the all-f32 version because matmul operands are bf16.
    assert jnp.allclose(logits, ref, rtol=2e-2, atol=2e-2), f"mismatch vs reference: {max_err}"

    print("KERNEL_OK")
</pallas_src>

<mosaic_0001>
module attributes {stable_mosaic.version = 11 : i64} {
  func.func @qkv_proj_kernel(%arg0: i32, %arg1: i32, %arg2: memref<1x8x32xf32, #tpu.memory_space<vmem>>, %arg3: memref<32x96xbf16, #tpu.memory_space<vmem>>, %arg4: memref<1x96xf32, #tpu.memory_space<vmem>>, %arg5: memref<1x8x32xbf16, #tpu.memory_space<vmem>>, %arg6: memref<1x8x32xbf16, #tpu.memory_space<vmem>>, %arg7: memref<1x8x32xbf16, #tpu.memory_space<vmem>>) attributes {dimension_semantics = [#tpu.dimension_semantics<parallel>, #tpu.dimension_semantics<parallel>], iteration_bounds = array<i64: 2, 1>, scalar_prefetch = 0 : i64, scratch_operands = 0 : i64, tpu.core_type = #tpu.core_type<tc>, window_params = [{transform_indices = @transform_0, window_bounds = array<i64: 1, 8, 32>}, {pipeline_mode = #tpu.pipeline_mode<synchronous>, transform_indices = @transform_1, window_bounds = array<i64: 32, 96>}, {pipeline_mode = #tpu.pipeline_mode<synchronous>, transform_indices = @transform_2, window_bounds = array<i64: 1, 96>}, {transform_indices = @transform_3, window_bounds = array<i64: 1, 8, 32>}, {transform_indices = @transform_4, window_bounds = array<i64: 1, 8, 32>}, {transform_indices = @transform_5, window_bounds = array<i64: 1, 8, 32>}]} {
    %c0 = arith.constant 0 : index
    %c0_0 = arith.constant 0 : index
    %c0_1 = arith.constant 0 : index
    %0 = vector.load %arg2[%c0, %c0_0, %c0_1] : memref<1x8x32xf32, #tpu.memory_space<vmem>>, vector<1x8x32xf32>
    %1 = vector.shape_cast %0 : vector<1x8x32xf32> to vector<8x32xf32>
    %2 = arith.truncf %1 : vector<8x32xf32> to vector<8x32xbf16>
    %c0_2 = arith.constant 0 : index
    %c0_3 = arith.constant 0 : index
    %3 = vector.load %arg3[%c0_2, %c0_3] : memref<32x96xbf16, #tpu.memory_space<vmem>>, vector<32x96xbf16>
    %cst = arith.constant dense<0.000000e+00> : vector<8x96xf32>
    %4 = tpu.matmul %2, %3, %cst {dimension_numbers = #tpu.dot_dimension_numbers<[1], [0], [0], [1], [0, 0, 1, 1], [], []>} : vector<8x32xbf16>, vector<32x96xbf16>, vector<8x96xf32> -> vector<8x96xf32>
    %c0_4 = arith.constant 0 : index
    %c0_5 = arith.constant 0 : index
    %5 = vector.load %arg4[%c0_4, %c0_5] : memref<1x96xf32, #tpu.memory_space<vmem>>, vector<1x96xf32>
    %6 = vector.shape_cast %5 : vector<1x96xf32> to vector<96xf32>
    %7 = vector.shape_cast %6 : vector<96xf32> to vector<1x96xf32>
    %8 = vector.broadcast %7 : vector<1x96xf32> to vector<8x96xf32>
    %9 = arith.addf %4, %8 : vector<8x96xf32>
    %10 = vector.extract_strided_slice %9 {offsets = [0, 0], sizes = [8, 32], strides = [1, 1]} : vector<8x96xf32> to vector<8x32xf32>
    %11 = arith.truncf %10 : vector<8x32xf32> to vector<8x32xbf16>
    %c0_6 = arith.constant 0 : index
    %c0_7 = arith.constant 0 : index
    %c0_8 = arith.constant 0 : index
    %12 = vector.load %arg5[%c0_6, %c0_7, %c0_8] : memref<1x8x32xbf16, #tpu.memory_space<vmem>>, vector<1x8x32xbf16>
    %13 = vector.shape_cast %12 : vector<1x8x32xbf16> to vector<8x32xbf16>
    %14 = vector.shape_cast %11 : vector<8x32xbf16> to vector<1x8x32xbf16>
    tpu.vector_store %arg5[%c0_6, %c0_7, %c0_8], %14 {strides = array<i32>} : memref<1x8x32xbf16, #tpu.memory_space<vmem>>, vector<1x8x32xbf16>,
    %15 = vector.extract_strided_slice %9 {offsets = [0, 32], sizes = [8, 32], strides = [1, 1]} : vector<8x96xf32> to vector<8x32xf32>
    %16 = arith.truncf %15 : vector<8x32xf32> to vector<8x32xbf16>
    %c0_9 = arith.constant 0 : index
    %c0_10 = arith.constant 0 : index
    %c0_11 = arith.constant 0 : index
    %17 = vector.load %arg6[%c0_9, %c0_10, %c0_11] : memref<1x8x32xbf16, #tpu.memory_space<vmem>>, vector<1x8x32xbf16>
    %18 = vector.shape_cast %17 : vector<1x8x32xbf16> to vector<8x32xbf16>
    %19 = vector.shape_cast %16 : vector<8x32xbf16> to vector<1x8x32xbf16>
    tpu.vector_store %arg6[%c0_9, %c0_10, %c0_11], %19 {strides = array<i32>} : memref<1x8x32xbf16, #tpu.memory_space<vmem>>, vector<1x8x32xbf16>,
    %20 = vector.extract_strided_slice %9 {offsets = [0, 64], sizes = [8, 32], strides = [1, 1]} : vector<8x96xf32> to vector<8x32xf32>
    %21 = arith.truncf %20 : vector<8x32xf32> to vector<8x32xbf16>
    %c0_12 = arith.constant 0 : index
    %c0_13 = arith.constant 0 : index
    %c0_14 = arith.constant 0 : index
    %22 = vector.load %arg7[%c0_12, %c0_13, %c0_14] : memref<1x8x32xbf16, #tpu.memory_space<vmem>>, vector<1x8x32xbf16>
    %23 = vector.shape_cast %22 : vector<1x8x32xbf16> to vector<8x32xbf16>
    %24 = vector.shape_cast %21 : vector<8x32xbf16> to vector<1x8x32xbf16>
    tpu.vector_store %arg7[%c0_12, %c0_13, %c0_14], %24 {strides = array<i32>} : memref<1x8x32xbf16, #tpu.memory_space<vmem>>, vector<1x8x32xbf16>,
    return
  }
  func.func @transform_0(%arg0: i32, %arg1: i32) -> (i32, i32, i32) {
    %c0_i32 = arith.constant 0 : i32
    %c0_i32_0 = arith.constant 0 : i32
    return %arg0, %arg1, %c0_i32 : i32, i32, i32
  }
  func.func @transform_1(%arg0: i32, %arg1: i32) -> (i32, i32) {
    %c0_i32 = arith.constant 0 : i32
    %c0_i32_0 = arith.constant 0 : i32
    %c0_i32_1 = arith.constant 0 : i32
    return %c0_i32, %c0_i32_0 : i32, i32
  }
  func.func @transform_2(%arg0: i32, %arg1: i32) -> (i32, i32) {
    %c0_i32 = arith.constant 0 : i32
    %c0_i32_0 = arith.constant 0 : i32
    %c0_i32_1 = arith.constant 0 : i32
    return %c0_i32, %c0_i32_0 : i32, i32
  }
  func.func @transform_3(%arg0: i32, %arg1: i32) -> (i32, i32, i32) {
    %c0_i32 = arith.constant 0 : i32
    %c0_i32_0 = arith.constant 0 : i32
    return %arg0, %arg1, %c0_i32 : i32, i32, i32
  }
  func.func @transform_4(%arg0: i32, %arg1: i32) -> (i32, i32, i32) {
    %c0_i32 = arith.constant 0 : i32
    %c0_i32_0 = arith.constant 0 : i32
    return %arg0, %arg1, %c0_i32 : i32, i32, i32
  }
  func.func @transform_5(%arg0: i32, %arg1: i32) -> (i32, i32, i32) {
    %c0_i32 = arith.constant 0 : i32
    %c0_i32_0 = arith.constant 0 : i32
    return %arg0, %arg1, %c0_i32 : i32, i32, i32
  }
}

module attributes {stable_mosaic.version = 11 : i64} {
  func.func @attn_block_kernel(%arg0: i32, %arg1: i32, %arg2: i32, %arg3: memref<1x8x32xf32, #tpu.memory_space<vmem>>, %arg4: memref<1x4x8x8xbf16, #tpu.memory_space<vmem>>, %arg5: memref<1x4x8x8xbf16, #tpu.memory_space<vmem>>, %arg6: memref<1x4x8x8xbf16, #tpu.memory_space<vmem>>, %arg7: memref<4x8x32xbf16, #tpu.memory_space<vmem>>, %arg8: memref<1x32xf32, #tpu.memory_space<vmem>>, %arg9: memref<1x32xf32, #tpu.memory_space<vmem>>, %arg10: memref<1x32xf32, #tpu.memory_space<vmem>>, %arg11: memref<32x128xbf16, #tpu.memory_space<vmem>>, %arg12: memref<1x128xf32, #tpu.memory_space<vmem>>, %arg13: memref<128x32xbf16, #tpu.memory_space<vmem>>, %arg14: memref<1x32xf32, #tpu.memory_space<vmem>>, %arg15: memref<1x32xf32, #tpu.memory_space<vmem>>, %arg16: memref<1x32xf32, #tpu.memory_space<vmem>>, %arg17: memref<1x8x32xf32, #tpu.memory_space<vmem>>, %arg18: memref<4x8x1xf32, #tpu.memory_space<vmem>>, %arg19: memref<4x8x1xf32, #tpu.memory_space<vmem>>, %arg20: memref<4x8x8xf32, #tpu.memory_space<vmem>>) attributes {dimension_semantics = [#tpu.dimension_semantics<parallel>, #tpu.dimension_semantics<parallel>, #tpu.dimension_semantics<arbitrary>], iteration_bounds = array<i64: 2, 1, 1>, scalar_prefetch = 0 : i64, scratch_operands = 3 : i64, tpu.core_type = #tpu.core_type<tc>, window_params = [{transform_indices = @transform_0, window_bounds = array<i64: 1, 8, 32>}, {transform_indices = @transform_1, window_bounds = array<i64: 1, 4, 8, 8>}, {transform_indices = @transform_2, window_bounds = array<i64: 1, 4, 8, 8>}, {transform_indices = @transform_3, window_bounds = array<i64: 1, 4, 8, 8>}, {pipeline_mode = #tpu.pipeline_mode<synchronous>, transform_indices = @transform_4, window_bounds = array<i64: 4, 8, 32>}, {pipeline_mode = #tpu.pipeline_mode<synchronous>, transform_indices = @transform_5, window_bounds = array<i64: 1, 32>}, {pipeline_mode = #tpu.pipeline_mode<synchronous>, transform_indices = @transform_6, window_bounds = array<i64: 1, 32>}, {pipeline_mode = #tpu.pipeline_mode<synchronous>, transform_indices = @transform_7, window_bounds = array<i64: 1, 32>}, {pipeline_mode = #tpu.pipeline_mode<synchronous>, transform_indices = @transform_8, window_bounds = array<i64: 32, 128>}, {pipeline_mode = #tpu.pipeline_mode<synchronous>, transform_indices = @transform_9, window_bounds = array<i64: 1, 128>}, {pipeline_mode = #tpu.pipeline_mode<synchronous>, transform_indices = @transform_10, window_bounds = array<i64: 128, 32>}, {pipeline_mode = #tpu.pipeline_mode<synchronous>, transform_indices = @transform_11, window_bounds = array<i64: 1, 32>}, {pipeline_mode = #tpu.pipeline_mode<synchronous>, transform_indices = @transform_12, window_bounds = array<i64: 1, 32>}, {pipeline_mode = #tpu.pipeline_mode<synchronous>, transform_indices = @transform_13, window_bounds = array<i64: 1, 32>}, {transform_indices = @transform_14, window_bounds = array<i64: 1, 8, 32>}]} {
    %c0_i32 = arith.constant 0 : i32
    %0 = arith.cmpi eq, %arg2, %c0_i32 : i32
    %1 = arith.extui %0 : i1 to i32
    %c0_i32_0 = arith.constant 0 : i32
    %2 = arith.cmpi ne, %1, %c0_i32_0 : i32
    scf.if %2 {
      %cst_36 = arith.constant 0xFF800000 : f32
      %38 = vector.broadcast %cst_36 : f32 to vector<4x8x1xf32>
      %c0_37 = arith.constant 0 : index
      %c0_38 = arith.constant 0 : index
      %c0_39 = arith.constant 0 : index
      %39 = vector.load %arg18[%c0_37, %c0_38, %c0_39] : memref<4x8x1xf32, #tpu.memory_space<vmem>>, vector<4x8x1xf32>
      tpu.vector_store %arg18[%c0_37, %c0_38, %c0_39], %38 {strides = array<i32>} : memref<4x8x1xf32, #tpu.memory_space<vmem>>, vector<4x8x1xf32>,
      %cst_40 = arith.constant 0.000000e+00 : f32
      %40 = vector.broadcast %cst_40 : f32 to vector<4x8x1xf32>
      %c0_41 = arith.constant 0 : index
      %c0_42 = arith.constant 0 : index
      %c0_43 = arith.constant 0 : index
      %41 = vector.load %arg19[%c0_41, %c0_42, %c0_43] : memref<4x8x1xf32, #tpu.memory_space<vmem>>, vector<4x8x1xf32>
      tpu.vector_store %arg19[%c0_41, %c0_42, %c0_43], %40 {strides = array<i32>} : memref<4x8x1xf32, #tpu.memory_space<vmem>>, vector<4x8x1xf32>,
      %cst_44 = arith.constant 0.000000e+00 : f32
      %42 = vector.broadcast %cst_44 : f32 to vector<4x8x8xf32>
      %c0_45 = arith.constant 0 : index
      %c0_46 = arith.constant 0 : index
      %c0_47 = arith.constant 0 : index
      %43 = vector.load %arg20[%c0_45, %c0_46, %c0_47] : memref<4x8x8xf32, #tpu.memory_space<vmem>>, vector<4x8x8xf32>
      tpu.vector_store %arg20[%c0_45, %c0_46, %c0_47], %42 {strides = array<i32>} : memref<4x8x8xf32, #tpu.memory_space<vmem>>, vector<4x8x8xf32>,
    } else {
    }
    %c0 = arith.constant 0 : index
    %c0_1 = arith.constant 0 : index
    %c0_2 = arith.constant 0 : index
    %c0_3 = arith.constant 0 : index
    %3 = vector.load %arg4[%c0, %c0_1, %c0_2, %c0_3] : memref<1x4x8x8xbf16, #tpu.memory_space<vmem>>, vector<1x4x8x8xbf16>
    %4 = vector.shape_cast %3 : vector<1x4x8x8xbf16> to vector<4x8x8xbf16>
    %c0_4 = arith.constant 0 : index
    %c0_5 = arith.constant 0 : index
    %c0_6 = arith.constant 0 : index
    %c0_7 = arith.constant 0 : index
    %5 = vector.load %arg5[%c0_4, %c0_5, %c0_6, %c0_7] : memref<1x4x8x8xbf16, #tpu.memory_space<vmem>>, vector<1x4x8x8xbf16>
    %6 = vector.shape_cast %5 : vector<1x4x8x8xbf16> to vector<4x8x8xbf16>
    %c0_8 = arith.constant 0 : index
    %c0_9 = arith.constant 0 : index
    %c0_10 = arith.constant 0 : index
    %c0_11 = arith.constant 0 : index
    %7 = vector.load %arg6[%c0_8, %c0_9, %c0_10, %c0_11] : memref<1x4x8x8xbf16, #tpu.memory_space<vmem>>, vector<1x4x8x8xbf16>
    %8 = vector.shape_cast %7 : vector<1x4x8x8xbf16> to vector<4x8x8xbf16>
    "tpu.trace_start"() <{level = 10 : i32, message = "hqd,hkd->hqk"}> : () -> ()
    %cst = arith.constant dense<0.000000e+00> : vector<4x8x8xf32>
    %9 = tpu.matmul %4, %6, %cst {dimension_numbers = #tpu.dot_dimension_numbers<[2], [2], [1], [1], [0, 0, 0, 1, 1, 1], [0], [0]>} : vector<4x8x8xbf16>, vector<4x8x8xbf16>, vector<4x8x8xf32> -> vector<4x8x8xf32>
    "tpu.trace_stop"() : () -> ()
    %cst_12 = arith.constant 0.353553385 : f32
    %10 = vector.broadcast %cst_12 : f32 to vector<4x8x8xf32>
    %11 = arith.mulf %9, %10 : vector<4x8x8xf32>
    %c0_13 = arith.constant 0 : index
    %c0_14 = arith.constant 0 : index
    %c0_15 = arith.constant 0 : index
    %12 = vector.load %arg18[%c0_13, %c0_14, %c0_15] : memref<4x8x1xf32, #tpu.memory_space<vmem>>, vector<4x8x1xf32>
    %cst_16 = arith.constant dense<0xFF800000> : vector<4x8xf32>
    %13 = vector.multi_reduction <maximumf>, %11, %cst_16 [2] : vector<4x8x8xf32> to vector<4x8xf32>
    %14 = vector.shape_cast %13 : vector<4x8xf32> to vector<4x8x1xf32>
    %15 = arith.maximumf %12, %14 : vector<4x8x1xf32>
    %16 = arith.subf %12, %15 : vector<4x8x1xf32>
    %17 = math.exp %16 : vector<4x8x1xf32>
    %18 = vector.broadcast %15 : vector<4x8x1xf32> to vector<4x8x8xf32>
    %19 = arith.subf %11, %18 : vector<4x8x8xf32>
    %20 = math.exp %19 : vector<4x8x8xf32>
    %c0_17 = arith.constant 0 : index
    %c0_18 = arith.constant 0 : index
    %c0_19 = arith.constant 0 : index
    %21 = vector.load %arg19[%c0_17, %c0_18, %c0_19] : memref<4x8x1xf32, #tpu.memory_space<vmem>>, vector<4x8x1xf32>
    %22 = arith.mulf %17, %21 : vector<4x8x1xf32>
    %cst_20 = arith.constant dense<0.000000e+00> : vector<4x8xf32>
    %23 = vector.multi_reduction <add>, %20, %cst_20 [2] : vector<4x8x8xf32> to vector<4x8xf32>
    %24 = vector.shape_cast %23 : vector<4x8xf32> to vector<4x8x1xf32>
    %25 = arith.addf %22, %24 : vector<4x8x1xf32>
    %c0_21 = arith.constant 0 : index
    %c0_22 = arith.constant 0 : index
    %c0_23 = arith.constant 0 : index
    %26 = vector.load %arg19[%c0_21, %c0_22, %c0_23] : memref<4x8x1xf32, #tpu.memory_space<vmem>>, vector<4x8x1xf32>
    tpu.vector_store %arg19[%c0_21, %c0_22, %c0_23], %25 {strides = array<i32>} : memref<4x8x1xf32, #tpu.memory_space<vmem>>, vector<4x8x1xf32>,
    %c0_24 = arith.constant 0 : index
    %c0_25 = arith.constant 0 : index
    %c0_26 = arith.constant 0 : index
    %27 = vector.load %arg20[%c0_24, %c0_25, %c0_26] : memref<4x8x8xf32, #tpu.memory_space<vmem>>, vector<4x8x8xf32>
    %28 = vector.broadcast %17 : vector<4x8x1xf32> to vector<4x8x8xf32>
    %29 = arith.mulf %28, %27 : vector<4x8x8xf32>
    %30 = arith.truncf %20 : vector<4x8x8xf32> to vector<4x8x8xbf16>
    "tpu.trace_start"() <{level = 10 : i32, message = "hqk,hkd->hqd"}> : () -> ()
    %cst_27 = arith.constant dense<0.000000e+00> : vector<4x8x8xf32>
    %31 = tpu.matmul %30, %8, %cst_27 {dimension_numbers = #tpu.dot_dimension_numbers<[2], [1], [1], [2], [0, 0, 0, 1, 1, 2], [0], [0]>} : vector<4x8x8xbf16>, vector<4x8x8xbf16>, vector<4x8x8xf32> -> vector<4x8x8xf32>
    "tpu.trace_stop"() : () -> ()
    %32 = arith.addf %29, %31 : vector<4x8x8xf32>
    %c0_28 = arith.constant 0 : index
    %c0_29 = arith.constant 0 : index
    %c0_30 = arith.constant 0 : index
    %33 = vector.load %arg20[%c0_28, %c0_29, %c0_30] : memref<4x8x8xf32, #tpu.memory_space<vmem>>, vector<4x8x8xf32>
    tpu.vector_store %arg20[%c0_28, %c0_29, %c0_30], %32 {strides = array<i32>} : memref<4x8x8xf32, #tpu.memory_space<vmem>>, vector<4x8x8xf32>,
    %c0_31 = arith.constant 0 : index
    %c0_32 = arith.constant 0 : index
    %c0_33 = arith.constant 0 : index
    %34 = vector.load %arg18[%c0_31, %c0_32, %c0_33] : memref<4x8x1xf32, #tpu.memory_space<vmem>>, vector<4x8x1xf32>
    tpu.vector_store %arg18[%c0_31, %c0_32, %c0_33], %15 {strides = array<i32>} : memref<4x8x1xf32, #tpu.memory_space<vmem>>, vector<4x8x1xf32>,
    %c0_i32_34 = arith.constant 0 : i32
    %35 = arith.cmpi eq, %arg2, %c0_i32_34 : i32
    %36 = arith.extui %35 : i1 to i32
    %c0_i32_35 = arith.constant 0 : i32
    %37 = arith.cmpi ne, %36, %c0_i32_35 : i32
    scf.if %37 {
      %c0_36 = arith.constant 0 : index
      %c0_37 = arith.constant 0 : index
      %c0_38 = arith.constant 0 : index
      %38 = vector.load %arg20[%c0_36, %c0_37, %c0_38] : memref<4x8x8xf32, #tpu.memory_space<vmem>>, vector<4x8x8xf32>
      %c0_39 = arith.constant 0 : index
      %c0_40 = arith.constant 0 : index
      %c0_41 = arith.constant 0 : index
      %39 = vector.load %arg19[%c0_39, %c0_40, %c0_41] : memref<4x8x1xf32, #tpu.memory_space<vmem>>, vector<4x8x1xf32>
      %40 = tpu.reciprocal %39 {approx = true} : vector<4x8x1xf32> -> vector<4x8x1xf32>
      %41 = vector.broadcast %40 : vector<4x8x1xf32> to vector<4x8x8xf32>
      %42 = arith.mulf %38, %41 : vector<4x8x8xf32>
      %43 = arith.truncf %42 : vector<4x8x8xf32> to vector<4x8x8xbf16>
      %c0_42 = arith.constant 0 : index
      %c0_43 = arith.constant 0 : index
      %c0_44 = arith.constant 0 : index
      %44 = vector.load %arg7[%c0_42, %c0_43, %c0_44] : memref<4x8x32xbf16, #tpu.memory_space<vmem>>, vector<4x8x32xbf16>
      "tpu.trace_start"() <{level = 10 : i32, message = "hqd,hde->hqe"}> : () -> ()
      %cst_45 = arith.constant dense<0.000000e+00> : vector<4x8x32xf32>
      %45 = tpu.matmul %43, %44, %cst_45 {dimension_numbers = #tpu.dot_dimension_numbers<[2], [1], [1], [2], [0, 0, 0, 1, 1, 2], [0], [0]>} : vector<4x8x8xbf16>, vector<4x8x32xbf16>, vector<4x8x32xf32> -> vector<4x8x32xf32>
      "tpu.trace_stop"() : () -> ()
      %cst_46 = arith.constant dense<0.000000e+00> : vector<8x32xf32>
      %46 = vector.multi_reduction <add>, %45, %cst_46 [0] : vector<4x8x32xf32> to vector<8x32xf32>
      %c0_47 = arith.constant 0 : index
      %c0_48 = arith.constant 0 : index
      %47 = vector.load %arg8[%c0_47, %c0_48] : memref<1x32xf32, #tpu.memory_space<vmem>>, vector<1x32xf32>
      %48 = vector.shape_cast %47 : vector<1x32xf32> to vector<32xf32>
      %49 = vector.shape_cast %48 : vector<32xf32> to vector<1x32xf32>
      %50 = vector.broadcast %49 : vector<1x32xf32> to vector<8x32xf32>
      %51 = arith.addf %46, %50 : vector<8x32xf32>
      %c0_49 = arith.constant 0 : index
      %c0_50 = arith.constant 0 : index
      %c0_51 = arith.constant 0 : index
      %52 = vector.load %arg3[%c0_49, %c0_50, %c0_51] : memref<1x8x32xf32, #tpu.memory_space<vmem>>, vector<1x8x32xf32>
      %53 = vector.shape_cast %52 : vector<1x8x32xf32> to vector<8x32xf32>
      %54 = arith.addf %53, %51 : vector<8x32xf32>
      %c0_52 = arith.constant 0 : index
      %c0_53 = arith.constant 0 : index
      %55 = vector.load %arg9[%c0_52, %c0_53] : memref<1x32xf32, #tpu.memory_space<vmem>>, vector<1x32xf32>
      %56 = vector.shape_cast %55 : vector<1x32xf32> to vector<32xf32>
      %c0_54 = arith.constant 0 : index
      %c0_55 = arith.constant 0 : index
      %57 = vector.load %arg10[%c0_54, %c0_55] : memref<1x32xf32, #tpu.memory_space<vmem>>, vector<1x32xf32>
      %58 = vector.shape_cast %57 : vector<1x32xf32> to vector<32xf32>
      %cst_56 = arith.constant dense<0.000000e+00> : vector<8xf32>
      %59 = vector.multi_reduction <add>, %54, %cst_56 [1] : vector<8x32xf32> to vector<8xf32>
      %60 = vector.shape_cast %59 : vector<8xf32> to vector<8x1xf32>
      %cst_57 = arith.constant 3.200000e+01 : f32
      %61 = vector.broadcast %cst_57 : f32 to vector<8x1xf32>
      %62 = arith.divf %60, %61 : vector<8x1xf32>
      %63 = vector.broadcast %62 : vector<8x1xf32> to vector<8x32xf32>
      %64 = arith.subf %54, %63 : vector<8x32xf32>
      %65 = arith.mulf %64, %64 : vector<8x32xf32>
      %cst_58 = arith.constant dense<0.000000e+00> : vector<8xf32>
      %66 = vector.multi_reduction <add>, %65, %cst_58 [1] : vector<8x32xf32> to vector<8xf32>
      %67 = vector.shape_cast %66 : vector<8xf32> to vector<8x1xf32>
      %cst_59 = arith.constant 3.200000e+01 : f32
      %68 = vector.broadcast %cst_59 : f32 to vector<8x1xf32>
      %69 = arith.divf %67, %68 : vector<8x1xf32>
      %70 = vector.broadcast %62 : vector<8x1xf32> to vector<8x32xf32>
      %71 = arith.subf %54, %70 : vector<8x32xf32>
      %cst_60 = arith.constant 9.99999974E-6 : f32
      %72 = vector.broadcast %cst_60 : f32 to vector<8x1xf32>
      %73 = arith.addf %69, %72 : vector<8x1xf32>
      %74 = math.rsqrt %73 : vector<8x1xf32>
      %75 = vector.broadcast %74 : vector<8x1xf32> to vector<8x32xf32>
      %76 = arith.mulf %71, %75 : vector<8x32xf32>
      %77 = vector.shape_cast %56 : vector<32xf32> to vector<1x32xf32>
      %78 = vector.broadcast %77 : vector<1x32xf32> to vector<8x32xf32>
      %79 = arith.mulf %76, %78 : vector<8x32xf32>
      %80 = vector.shape_cast %58 : vector<32xf32> to vector<1x32xf32>
      %81 = vector.broadcast %80 : vector<1x32xf32> to vector<8x32xf32>
      %82 = arith.addf %79, %81 : vector<8x32xf32>
      %83 = arith.truncf %82 : vector<8x32xf32> to vector<8x32xbf16>
      %c0_61 = arith.constant 0 : index
      %c0_62 = arith.constant 0 : index
      %84 = vector.load %arg11[%c0_61, %c0_62] : memref<32x128xbf16, #tpu.memory_space<vmem>>, vector<32x128xbf16>
      %cst_63 = arith.constant dense<0.000000e+00> : vector<8x128xf32>
      %85 = tpu.matmul %83, %84, %cst_63 {dimension_numbers = #tpu.dot_dimension_numbers<[1], [0], [0], [1], [0, 0, 1, 1], [], []>} : vector<8x32xbf16>, vector<32x128xbf16>, vector<8x128xf32> -> vector<8x128xf32>
      %c0_64 = arith.constant 0 : index
      %c0_65 = arith.constant 0 : index
      %86 = vector.load %arg12[%c0_64, %c0_65] : memref<1x128xf32, #tpu.memory_space<vmem>>, vector<1x128xf32>
      %87 = vector.shape_cast %86 : vector<1x128xf32> to vector<128xf32>
      %88 = vector.shape_cast %87 : vector<128xf32> to vector<1x128xf32>
      %89 = vector.broadcast %88 : vector<1x128xf32> to vector<8x128xf32>
      %90 = arith.addf %85, %89 : vector<8x128xf32>
      %cst_66 = arith.constant 5.000000e-01 : f32
      %91 = vector.broadcast %cst_66 : f32 to vector<8x128xf32>
      %92 = arith.mulf %91, %90 : vector<8x128xf32>
      %cst_67 = arith.constant 2.000000e+00 : f32
      %93 = math.sqrt %cst_67 : f32
      %94 = vector.broadcast %93 : f32 to vector<8x128xf32>
      %95 = arith.divf %90, %94 : vector<8x128xf32>
      %96 = math.erf %95 : vector<8x128xf32>
      %cst_68 = arith.constant 1.000000e+00 : f32
      %97 = vector.broadcast %cst_68 : f32 to vector<8x128xf32>
      %98 = arith.addf %97, %96 : vector<8x128xf32>
      %99 = arith.mulf %92, %98 : vector<8x128xf32>
      %100 = arith.truncf %99 : vector<8x128xf32> to vector<8x128xbf16>
      %c0_69 = arith.constant 0 : index
      %c0_70 = arith.constant 0 : index
      %101 = vector.load %arg13[%c0_69, %c0_70] : memref<128x32xbf16, #tpu.memory_space<vmem>>, vector<128x32xbf16>
      %cst_71 = arith.constant dense<0.000000e+00> : vector<8x32xf32>
      %102 = tpu.matmul %100, %101, %cst_71 {dimension_numbers = #tpu.dot_dimension_numbers<[1], [0], [0], [1], [0, 0, 1, 1], [], []>} : vector<8x128xbf16>, vector<128x32xbf16>, vector<8x32xf32> -> vector<8x32xf32>
      %c0_72 = arith.constant 0 : index
      %c0_73 = arith.constant 0 : index
      %103 = vector.load %arg14[%c0_72, %c0_73] : memref<1x32xf32, #tpu.memory_space<vmem>>, vector<1x32xf32>
      %104 = vector.shape_cast %103 : vector<1x32xf32> to vector<32xf32>
      %105 = vector.shape_cast %104 : vector<32xf32> to vector<1x32xf32>
      %106 = vector.broadcast %105 : vector<1x32xf32> to vector<8x32xf32>
      %107 = arith.addf %102, %106 : vector<8x32xf32>
      %108 = arith.addf %82, %107 : vector<8x32xf32>
      %c0_74 = arith.constant 0 : index
      %c0_75 = arith.constant 0 : index
      %109 = vector.load %arg15[%c0_74, %c0_75] : memref<1x32xf32, #tpu.memory_space<vmem>>, vector<1x32xf32>
      %110 = vector.shape_cast %109 : vector<1x32xf32> to vector<32xf32>
      %c0_76 = arith.constant 0 : index
      %c0_77 = arith.constant 0 : index
      %111 = vector.load %arg16[%c0_76, %c0_77] : memref<1x32xf32, #tpu.memory_space<vmem>>, vector<1x32xf32>
      %112 = vector.shape_cast %111 : vector<1x32xf32> to vector<32xf32>
      %cst_78 = arith.constant dense<0.000000e+00> : vector<8xf32>
      %113 = vector.multi_reduction <add>, %108, %cst_78 [1] : vector<8x32xf32> to vector<8xf32>
      %114 = vector.shape_cast %113 : vector<8xf32> to vector<8x1xf32>
      %cst_79 = arith.constant 3.200000e+01 : f32
      %115 = vector.broadcast %cst_79 : f32 to vector<8x1xf32>
      %116 = arith.divf %114, %115 : vector<8x1xf32>
      %117 = vector.broadcast %116 : vector<8x1xf32> to vector<8x32xf32>
      %118 = arith.subf %108, %117 : vector<8x32xf32>
      %119 = arith.mulf %118, %118 : vector<8x32xf32>
      %cst_80 = arith.constant dense<0.000000e+00> : vector<8xf32>
      %120 = vector.multi_reduction <add>, %119, %cst_80 [1] : vector<8x32xf32> to vector<8xf32>
      %121 = vector.shape_cast %120 : vector<8xf32> to vector<8x1xf32>
      %cst_81 = arith.constant 3.200000e+01 : f32
      %122 = vector.broadcast %cst_81 : f32 to vector<8x1xf32>
      %123 = arith.divf %121, %122 : vector<8x1xf32>
      %124 = vector.broadcast %116 : vector<8x1xf32> to vector<8x32xf32>
      %125 = arith.subf %108, %124 : vector<8x32xf32>
      %cst_82 = arith.constant 9.99999974E-6 : f32
      %126 = vector.broadcast %cst_82 : f32 to vector<8x1xf32>
      %127 = arith.addf %123, %126 : vector<8x1xf32>
      %128 = math.rsqrt %127 : vector<8x1xf32>
      %129 = vector.broadcast %128 : vector<8x1xf32> to vector<8x32xf32>
      %130 = arith.mulf %125, %129 : vector<8x32xf32>
      %131 = vector.shape_cast %110 : vector<32xf32> to vector<1x32xf32>
      %132 = vector.broadcast %131 : vector<1x32xf32> to vector<8x32xf32>
      %133 = arith.mulf %130, %132 : vector<8x32xf32>
      %134 = vector.shape_cast %112 : vector<32xf32> to vector<1x32xf32>
      %135 = vector.broadcast %134 : vector<1x32xf32> to vector<8x32xf32>
      %136 = arith.addf %133, %135 : vector<8x32xf32>
      %c0_83 = arith.constant 0 : index
      %c0_84 = arith.constant 0 : index
      %c0_85 = arith.constant 0 : index
      %137 = vector.load %arg17[%c0_83, %c0_84, %c0_85] : memref<1x8x32xf32, #tpu.memory_space<vmem>>, vector<1x8x32xf32>
      %138 = vector.shape_cast %137 : vector<1x8x32xf32> to vector<8x32xf32>
      %139 = vector.shape_cast %136 : vector<8x32xf32> to vector<1x8x32xf32>
      tpu.vector_store %arg17[%c0_83, %c0_84, %c0_85], %139 {strides = array<i32>} : memref<1x8x32xf32, #tpu.memory_space<vmem>>, vector<1x8x32xf32>,
    } else {
    }
    return
  }
  func.func @transform_0(%arg0: i32, %arg1: i32, %arg2: i32) -> (i32, i32, i32) {
    %c0_i32 = arith.constant 0 : i32
    %c0_i32_0 = arith.constant 0 : i32
    return %arg0, %arg1, %c0_i32 : i32, i32, i32
  }
  func.func @transform_1(%arg0: i32, %arg1: i32, %arg2: i32) -> (i32, i32, i32, i32) {
    %c0_i32 = arith.constant 0 : i32
    %c0_i32_0 = arith.constant 0 : i32
    %c0_i32_1 = arith.constant 0 : i32
    return %arg0, %c0_i32, %arg1, %c0_i32_0 : i32, i32, i32, i32
  }
  func.func @transform_2(%arg0: i32, %arg1: i32, %arg2: i32) -> (i32, i32, i32, i32) {
    %c0_i32 = arith.constant 0 : i32
    %c0_i32_0 = arith.constant 0 : i32
    %c0_i32_1 = arith.constant 0 : i32
    return %arg0, %c0_i32, %arg2, %c0_i32_0 : i32, i32, i32, i32
  }
  func.func @transform_3(%arg0: i32, %arg1: i32, %arg2: i32) -> (i32, i32, i32, i32) {
    %c0_i32 = arith.constant 0 : i32
    %c0_i32_0 = arith.constant 0 : i32
    %c0_i32_1 = arith.constant 0 : i32
    return %arg0, %c0_i32, %arg2, %c0_i32_0 : i32, i32, i32, i32
  }
  func.func @transform_4(%arg0: i32, %arg1: i32, %arg2: i32) -> (i32, i32, i32) {
    %c0_i32 = arith.constant 0 : i32
    %c0_i32_0 = arith.constant 0 : i32
    %c0_i32_1 = arith.constant 0 : i32
    %c0_i32_2 = arith.constant 0 : i32
    return %c0_i32, %c0_i32_0, %c0_i32_1 : i32, i32, i32
  }
  func.func @transform_5(%arg0: i32, %arg1: i32, %arg2: i32) -> (i32, i32) {
    %c0_i32 = arith.constant 0 : i32
    %c0_i32_0 = arith.constant 0 : i32
    %c0_i32_1 = arith.constant 0 : i32
    return %c0_i32, %c0_i32_0 : i32, i32
  }
  func.func @transform_6(%arg0: i32, %arg1: i32, %arg2: i32) -> (i32, i32) {
    %c0_i32 = arith.constant 0 : i32
    %c0_i32_0 = arith.constant 0 : i32
    %c0_i32_1 = arith.constant 0 : i32
    return %c0_i32, %c0_i32_0 : i32, i32
  }
  func.func @transform_7(%arg0: i32, %arg1: i32, %arg2: i32) -> (i32, i32) {
    %c0_i32 = arith.constant 0 : i32
    %c0_i32_0 = arith.constant 0 : i32
    %c0_i32_1 = arith.constant 0 : i32
    return %c0_i32, %c0_i32_0 : i32, i32
  }
  func.func @transform_8(%arg0: i32, %arg1: i32, %arg2: i32) -> (i32, i32) {
    %c0_i32 = arith.constant 0 : i32
    %c0_i32_0 = arith.constant 0 : i32
    %c0_i32_1 = arith.constant 0 : i32
    return %c0_i32, %c0_i32_0 : i32, i32
  }
  func.func @transform_9(%arg0: i32, %arg1: i32, %arg2: i32) -> (i32, i32) {
    %c0_i32 = arith.constant 0 : i32
    %c0_i32_0 = arith.constant 0 : i32
    %c0_i32_1 = arith.constant 0 : i32
    return %c0_i32, %c0_i32_0 : i32, i32
  }
  func.func @transform_10(%arg0: i32, %arg1: i32, %arg2: i32) -> (i32, i32) {
    %c0_i32 = arith.constant 0 : i32
    %c0_i32_0 = arith.constant 0 : i32
    %c0_i32_1 = arith.constant 0 : i32
    return %c0_i32, %c0_i32_0 : i32, i32
  }
  func.func @transform_11(%arg0: i32, %arg1: i32, %arg2: i32) -> (i32, i32) {
    %c0_i32 = arith.constant 0 : i32
    %c0_i32_0 = arith.constant 0 : i32
    %c0_i32_1 = arith.constant 0 : i32
    return %c0_i32, %c0_i32_0 : i32, i32
  }
  func.func @transform_12(%arg0: i32, %arg1: i32, %arg2: i32) -> (i32, i32) {
    %c0_i32 = arith.constant 0 : i32
    %c0_i32_0 = arith.constant 0 : i32
    %c0_i32_1 = arith.constant 0 : i32
    return %c0_i32, %c0_i32_0 : i32, i32
  }
  func.func @transform_13(%arg0: i32, %arg1: i32, %arg2: i32) -> (i32, i32) {
    %c0_i32 = arith.constant 0 : i32
    %c0_i32_0 = arith.constant 0 : i32
    %c0_i32_1 = arith.constant 0 : i32
    return %c0_i32, %c0_i32_0 : i32, i32
  }
  func.func @transform_14(%arg0: i32, %arg1: i32, %arg2: i32) -> (i32, i32, i32) {
    %c0_i32 = arith.constant 0 : i32
    %c0_i32_0 = arith.constant 0 : i32
    return %arg0, %arg1, %c0_i32 : i32, i32, i32
  }
}

module attributes {stable_mosaic.version = 11 : i64} {
  func.func @classifier_head_kernel(%arg0: i32, %arg1: memref<2x32xf32, #tpu.memory_space<vmem>>, %arg2: memref<1x32xf32, #tpu.memory_space<vmem>>, %arg3: memref<1x32xf32, #tpu.memory_space<vmem>>, %arg4: memref<32x2xbf16, #tpu.memory_space<vmem>>, %arg5: memref<1x2xf32, #tpu.memory_space<vmem>>, %arg6: memref<2x2xf32, #tpu.memory_space<vmem>>) attributes {dimension_semantics = [#tpu.dimension_semantics<arbitrary>], iteration_bounds = array<i64: 1>, scalar_prefetch = 0 : i64, scratch_operands = 0 : i64, tpu.core_type = #tpu.core_type<tc>, window_params = [{pipeline_mode = #tpu.pipeline_mode<synchronous>, transform_indices = @transform_0, window_bounds = array<i64: 2, 32>}, {pipeline_mode = #tpu.pipeline_mode<synchronous>, transform_indices = @transform_1, window_bounds = array<i64: 1, 32>}, {pipeline_mode = #tpu.pipeline_mode<synchronous>, transform_indices = @transform_2, window_bounds = array<i64: 1, 32>}, {pipeline_mode = #tpu.pipeline_mode<synchronous>, transform_indices = @transform_3, window_bounds = array<i64: 32, 2>}, {pipeline_mode = #tpu.pipeline_mode<synchronous>, transform_indices = @transform_4, window_bounds = array<i64: 1, 2>}, {pipeline_mode = #tpu.pipeline_mode<synchronous>, transform_indices = @transform_5, window_bounds = array<i64: 2, 2>}]} {
    %c0 = arith.constant 0 : index
    %c0_0 = arith.constant 0 : index
    %0 = vector.load %arg1[%c0, %c0_0] : memref<2x32xf32, #tpu.memory_space<vmem>>, vector<2x32xf32>
    %c0_1 = arith.constant 0 : index
    %c0_2 = arith.constant 0 : index
    %1 = vector.load %arg2[%c0_1, %c0_2] : memref<1x32xf32, #tpu.memory_space<vmem>>, vector<1x32xf32>
    %2 = vector.shape_cast %1 : vector<1x32xf32> to vector<32xf32>
    %c0_3 = arith.constant 0 : index
    %c0_4 = arith.constant 0 : index
    %3 = vector.load %arg3[%c0_3, %c0_4] : memref<1x32xf32, #tpu.memory_space<vmem>>, vector<1x32xf32>
    %4 = vector.shape_cast %3 : vector<1x32xf32> to vector<32xf32>
    %cst = arith.constant dense<0.000000e+00> : vector<2xf32>
    %5 = vector.multi_reduction <add>, %0, %cst [1] : vector<2x32xf32> to vector<2xf32>
    %6 = vector.shape_cast %5 : vector<2xf32> to vector<2x1xf32>
    %cst_5 = arith.constant 3.200000e+01 : f32
    %7 = vector.broadcast %cst_5 : f32 to vector<2x1xf32>
    %8 = arith.divf %6, %7 : vector<2x1xf32>
    %9 = vector.broadcast %8 : vector<2x1xf32> to vector<2x32xf32>
    %10 = arith.subf %0, %9 : vector<2x32xf32>
    %11 = arith.mulf %10, %10 : vector<2x32xf32>
    %cst_6 = arith.constant dense<0.000000e+00> : vector<2xf32>
    %12 = vector.multi_reduction <add>, %11, %cst_6 [1] : vector<2x32xf32> to vector<2xf32>
    %13 = vector.shape_cast %12 : vector<2xf32> to vector<2x1xf32>
    %cst_7 = arith.constant 3.200000e+01 : f32
    %14 = vector.broadcast %cst_7 : f32 to vector<2x1xf32>
    %15 = arith.divf %13, %14 : vector<2x1xf32>
    %16 = vector.broadcast %8 : vector<2x1xf32> to vector<2x32xf32>
    %17 = arith.subf %0, %16 : vector<2x32xf32>
    %cst_8 = arith.constant 9.99999974E-6 : f32
    %18 = vector.broadcast %cst_8 : f32 to vector<2x1xf32>
    %19 = arith.addf %15, %18 : vector<2x1xf32>
    %20 = math.rsqrt %19 : vector<2x1xf32>
    %21 = vector.broadcast %20 : vector<2x1xf32> to vector<2x32xf32>
    %22 = arith.mulf %17, %21 : vector<2x32xf32>
    %23 = vector.shape_cast %2 : vector<32xf32> to vector<1x32xf32>
    %24 = vector.broadcast %23 : vector<1x32xf32> to vector<2x32xf32>
    %25 = arith.mulf %22, %24 : vector<2x32xf32>
    %26 = vector.shape_cast %4 : vector<32xf32> to vector<1x32xf32>
    %27 = vector.broadcast %26 : vector<1x32xf32> to vector<2x32xf32>
    %28 = arith.addf %25, %27 : vector<2x32xf32>
    %29 = arith.truncf %28 : vector<2x32xf32> to vector<2x32xbf16>
    %c0_9 = arith.constant 0 : index
    %c0_10 = arith.constant 0 : index
    %30 = vector.load %arg4[%c0_9, %c0_10] : memref<32x2xbf16, #tpu.memory_space<vmem>>, vector<32x2xbf16>
    %cst_11 = arith.constant dense<0.000000e+00> : vector<2x2xf32>
    %31 = tpu.matmul %29, %30, %cst_11 {dimension_numbers = #tpu.dot_dimension_numbers<[1], [0], [0], [1], [0, 0, 1, 1], [], []>} : vector<2x32xbf16>, vector<32x2xbf16>, vector<2x2xf32> -> vector<2x2xf32>
    %c0_12 = arith.constant 0 : index
    %c0_13 = arith.constant 0 : index
    %32 = vector.load %arg5[%c0_12, %c0_13] : memref<1x2xf32, #tpu.memory_space<vmem>>, vector<1x2xf32>
    %33 = vector.shape_cast %32 : vector<1x2xf32> to vector<2xf32>
    %34 = vector.shape_cast %33 : vector<2xf32> to vector<1x2xf32>
    %35 = vector.broadcast %34 : vector<1x2xf32> to vector<2x2xf32>
    %36 = arith.addf %31, %35 : vector<2x2xf32>
    %c0_14 = arith.constant 0 : index
    %c0_15 = arith.constant 0 : index
    %37 = vector.load %arg6[%c0_14, %c0_15] : memref<2x2xf32, #tpu.memory_space<vmem>>, vector<2x2xf32>
    tpu.vector_store %arg6[%c0_14, %c0_15], %36 {strides = array<i32>} : memref<2x2xf32, #tpu.memory_space<vmem>>, vector<2x2xf32>,
    return
  }
  func.func @transform_0(%arg0: i32) -> (i32, i32) {
    %c0_i32 = arith.constant 0 : i32
    %c0_i32_0 = arith.constant 0 : i32
    %c0_i32_1 = arith.constant 0 : i32
    return %c0_i32, %c0_i32_0 : i32, i32
  }
  func.func @transform_1(%arg0: i32) -> (i32, i32) {
    %c0_i32 = arith.constant 0 : i32
    %c0_i32_0 = arith.constant 0 : i32
    %c0_i32_1 = arith.constant 0 : i32
    return %c0_i32, %c0_i32_0 : i32, i32
  }
  func.func @transform_2(%arg0: i32) -> (i32, i32) {
    %c0_i32 = arith.constant 0 : i32
    %c0_i32_0 = arith.constant 0 : i32
    %c0_i32_1 = arith.constant 0 : i32
    return %c0_i32, %c0_i32_0 : i32, i32
  }
  func.func @transform_3(%arg0: i32) -> (i32, i32) {
    %c0_i32 = arith.constant 0 : i32
    %c0_i32_0 = arith.constant 0 : i32
    %c0_i32_1 = arith.constant 0 : i32
    return %c0_i32, %c0_i32_0 : i32, i32
  }
  func.func @transform_4(%arg0: i32) -> (i32, i32) {
    %c0_i32 = arith.constant 0 : i32
    %c0_i32_0 = arith.constant 0 : i32
    %c0_i32_1 = arith.constant 0 : i32
    return %c0_i32, %c0_i32_0 : i32, i32
  }
  func.func @transform_5(%arg0: i32) -> (i32, i32) {
    %c0_i32 = arith.constant 0 : i32
    %c0_i32_0 = arith.constant 0 : i32
    %c0_i32_1 = arith.constant 0 : i32
    return %c0_i32, %c0_i32_0 : i32, i32
  }
}

</mosaic_0001>

<llo_original>
// kernel: nanogpt_classifier.5
$region0: #{nanogpt_classifier.5}
  #allocation0 [shape = 'u32[]', space=smem, size = 0x4, offset = 0x4, fixed_abs, tag = 'smem constant byte address 0x4 - core index']
  #allocation1 [shape = 'u32[144,128]{1,0:T(1,128)}', space=vmem, size = 0x12000, scoped, tag = 'internal scratch']
  %s0 = inlined_call_operand.vmem [shape: f32[2,8,32], index: 0, kind: input, shape index: {}]
  %s1 = inlined_call_operand.vmem [shape: bf16[32,96], index: 1, kind: input, shape index: {}]
  %s2 = inlined_call_operand.vmem [shape: f32[1,96], index: 2, kind: input, shape index: {}]
  %s3 = inlined_call_operand.vmem [shape: bf16[2,8,32], index: 3, kind: output, shape index: {0}]
  %s4 = inlined_call_operand.vmem [shape: bf16[2,8,32], index: 4, kind: output, shape index: {1}]
  %s5 = inlined_call_operand.vmem [shape: bf16[2,8,32], index: 5, kind: output, shape index: {2}]
  %6 = xla_tuple %s3, %s4, %s5
  %s7 = sld [smem:[#allocation0]]
  $region61: #{nanogpt_classifier.5} parent=0
    _
  %s9 = ssub.s32 1, %s7
  %s10 = scalar_select 0, %s9, %s7
  loop: start=0, step=1, limit=4
  $region2: #{nanogpt_classifier.5} parent=0 // loop_pre_header
    _
  $region3: #{nanogpt_classifier.5} parent=0 // loop_header
    %s12 = sphi 0, %s16
    %p13 = scmp.ge.s32.totalorder %s12, 4
    %s19 = sphi 0, %s31
    %s20 = sphi 0, %s27
    %s21 = sphi 0, %s19
    %s22 = sphi 0, %s20
    %s23 = sphi 0, %s21
    %s24 = sphi 0, %s22
    %s36 = sphi 0, %s38
    %s39 = sphi 0, %s36
    %s40 = sphi 0, %s39
    %s56 = sphi 0, %s40
    %s60 = sphi 0, %s60
    %s62 = sphi 0, %s60
    %s63 = sphi 0, %s62
    %s77 = sphi 0, %s63
    %s81 = sphi 0, %s81
    %s83 = sphi 0, %s81
    %s84 = sphi 0, %s83
    %s98 = sphi 0, %s84
    %s106 = sphi 0, %s108
    %s109 = sphi 0, %s106
    %s110 = sphi 0, %s109
    %s126 = sphi 0, %s110
    %s134 = sphi 0, %s136
    %s137 = sphi 0, %s134
    %s138 = sphi 0, %s137
    %s154 = sphi 0, %s138
    %s162 = sphi 0, %s164
    %s165 = sphi 0, %s162
    %s166 = sphi 0, %s165
    %s182 = sphi 0, %s166
  $region4: #{nanogpt_classifier.5} parent=0 // loop_header_branch
    %15 = sbr.rel (%p13) target = $region8
  $region5: #{nanogpt_classifier.5} parent=0 // loop_body
    %s17 = ssub.s32 %s12, 1
    %s18 = ssub.s32 %s12, 2
    %s25 = sadd.s32 1, %s20
    %p26 = scmp.ge.s32.totalorder %s25, 1
    %s27 = scalar_select %p26, 0, %s25
    %s28 = sadd.s32 1, %s19
    %s29 = scalar_select %p26, %s28, %s19
    %p30 = scmp.ge.s32.totalorder %s29, 2
    %s31 = scalar_select %p30, 0, %s29
    %s32 = ssub.s32 %s19, %s31
    %s33 = ssub.s32 %s20, %s27
    %s34 = sor.u32 %s32, %s33
    %p35 = scmp.eq.s32.totalorder %s34, 0
    %s37 = sadd.s32 %s36, 1
    %s38 = scalar_select %p35, %s36, %s37
    %p41 = pneg %p35
    %p42 = scmp.eq.s32.totalorder %s12, 1
    %p43 = por %p41, %p42
    %p44 = scmp.ne.s32.totalorder %s36, %s39
    %p45 = scmp.eq.s32.totalorder %s12, 0
    %p46 = por %p44, %p45
    %p47 = scmp.ne.s32.totalorder %s36, %s39
    %p48 = scmp.eq.s32.totalorder %s17, 1
    %p49 = por %p47, %p48
    %p50 = scmp.ne.s32.totalorder %s39, %s40
    %p51 = scmp.eq.s32.totalorder %s17, 0
    %p52 = por %p50, %p51
    %p53 = scmp.ne.s32.totalorder %s39, %s40
    %p54 = scmp.eq.s32.totalorder %s18, 1
    %p55 = por %p53, %p54
    %p57 = scmp.ne.s32.totalorder %s40, %s56
    %p58 = scmp.eq.s32.totalorder %s18, 0
    %p59 = por %p57, %p58
    %s61 = sadd.s32 %s60, 1
    %p64 = scmp.eq.s32.totalorder %s12, 1
    %p65 = scmp.ne.s32.totalorder %s60, %s62
    %p66 = scmp.eq.s32.totalorder %s12, 0
    %p67 = por %p65, %p66
    %p68 = scmp.ne.s32.totalorder %s60, %s62
    %p69 = scmp.eq.s32.totalorder %s17, 1
    %p70 = por %p68, %p69
    %p71 = scmp.ne.s32.totalorder %s62, %s63
    %p72 = scmp.eq.s32.totalorder %s17, 0
    %p73 = por %p71, %p72
    %p74 = scmp.ne.s32.totalorder %s62, %s63
    %p75 = scmp.eq.s32.totalorder %s18, 1
    %p76 = por %p74, %p75
    %p78 = scmp.ne.s32.totalorder %s63, %s77
    %p79 = scmp.eq.s32.totalorder %s18, 0
    %p80 = por %p78, %p79
    %s82 = sadd.s32 %s81, 1
    %p85 = scmp.eq.s32.totalorder %s12, 1
    %p86 = scmp.ne.s32.totalorder %s81, %s83
    %p87 = scmp.eq.s32.totalorder %s12, 0
    %p88 = por %p86, %p87
    %p89 = scmp.ne.s32.totalorder %s81, %s83
    %p90 = scmp.eq.s32.totalorder %s17, 1
    %p91 = por %p89, %p90
    %p92 = scmp.ne.s32.totalorder %s83, %s84
    %p93 = scmp.eq.s32.totalorder %s17, 0
    %p94 = por %p92, %p93
    %p95 = scmp.ne.s32.totalorder %s83, %s84
    %p96 = scmp.eq.s32.totalorder %s18, 1
    %p97 = por %p95, %p96
    %p99 = scmp.ne.s32.totalorder %s84, %s98
    %p100 = scmp.eq.s32.totalorder %s18, 0
    %p101 = por %p99, %p100
    %s102 = ssub.s32 %s19, %s31
    %s103 = ssub.s32 %s20, %s27
    %s104 = sor.u32 %s102, %s103
    %p105 = scmp.eq.s32.totalorder %s104, 0
    %s107 = sadd.s32 %s106, 1
    %s108 = scalar_select %p105, %s106, %s107
    %p111 = pneg %p105
    %p112 = scmp.eq.s32.totalorder %s12, 1
    %p113 = por %p111, %p112
    %p114 = scmp.ne.s32.totalorder %s106, %s109
    %p115 = scmp.eq.s32.totalorder %s12, 0
    %p116 = por %p114, %p115
    %p117 = scmp.ne.s32.totalorder %s106, %s109
    %p118 = scmp.eq.s32.totalorder %s17, 1
    %p119 = por %p117, %p118
    %p120 = scmp.ne.s32.totalorder %s109, %s110
    %p121 = scmp.eq.s32.totalorder %s17, 0
    %p122 = por %p120, %p121
    %p123 = scmp.ne.s32.totalorder %s109, %s110
    %p124 = scmp.eq.s32.totalorder %s18, 1
    %p125 = por %p123, %p124
    %p127 = scmp.ne.s32.totalorder %s110, %s126
    %p128 = scmp.eq.s32.totalorder %s18, 0
    %p129 = por %p127, %p128
    %s130 = ssub.s32 %s19, %s31
    %s131 = ssub.s32 %s20, %s27
    %s132 = sor.u32 %s130, %s131
    %p133 = scmp.eq.s32.totalorder %s132, 0
    %s135 = sadd.s32 %s134, 1
    %s136 = scalar_select %p133, %s134, %s135
    %p139 = pneg %p133
    %p140 = scmp.eq.s32.totalorder %s12, 1
    %p141 = por %p139, %p140
    %p142 = scmp.ne.s32.totalorder %s134, %s137
    %p143 = scmp.eq.s32.totalorder %s12, 0
    %p144 = por %p142, %p143
    %p145 = scmp.ne.s32.totalorder %s134, %s137
    %p146 = scmp.eq.s32.totalorder %s17, 1
    %p147 = por %p145, %p146
    %p148 = scmp.ne.s32.totalorder %s137, %s138
    %p149 = scmp.eq.s32.totalorder %s17, 0
    %p150 = por %p148, %p149
    %p151 = scmp.ne.s32.totalorder %s137, %s138
    %p152 = scmp.eq.s32.totalorder %s18, 1
    %p153 = por %p151, %p152
    %p155 = scmp.ne.s32.totalorder %s138, %s154
    %p156 = scmp.eq.s32.totalorder %s18, 0
    %p157 = por %p155, %p156
    %s158 = ssub.s32 %s19, %s31
    %s159 = ssub.s32 %s20, %s27
    %s160 = sor.u32 %s158, %s159
    %p161 = scmp.eq.s32.totalorder %s160, 0
    %s163 = sadd.s32 %s162, 1
    %s164 = scalar_select %p161, %s162, %s163
    %p167 = pneg %p161
    %p168 = scmp.eq.s32.totalorder %s12, 1
    %p169 = por %p167, %p168
    %p170 = scmp.ne.s32.totalorder %s162, %s165
    %p171 = scmp.eq.s32.totalorder %s12, 0
    %p172 = por %p170, %p171
    %p173 = scmp.ne.s32.totalorder %s162, %s165
    %p174 = scmp.eq.s32.totalorder %s17, 1
    %p175 = por %p173, %p174
    %p176 = scmp.ne.s32.totalorder %s165, %s166
    %p177 = scmp.eq.s32.totalorder %s17, 0
    %p178 = por %p176, %p177
    %p179 = scmp.ne.s32.totalorder %s165, %s166
    %p180 = scmp.eq.s32.totalorder %s18, 1
    %p181 = por %p179, %p180
    %p183 = scmp.ne.s32.totalorder %s166, %s182
    %p184 = scmp.eq.s32.totalorder %s18, 0
    %p185 = por %p183, %p184
    %p186 = scmp.le.s32.totalorder 1, %s12
    %p187 = scmp.lt.s32.totalorder %s12, 3
    %p188 = pnand %p186, %p187
    %p189 = pneg %p188
    // Predicated region
    $region9: #{nanogpt_classifier.5} parent=5 // pred_check
      _
    $region10: #{nanogpt_classifier.5} parent=5 // pred_check_branch
      %191 = sbr.rel (%p188) target = $region12
    $region11: #{nanogpt_classifier.5} parent=5 // pred_region
      %s192 = ssub.s32 %s12, 1
      // Predicated region
      $region13: #{nanogpt_classifier.5} parent=11 // pred_check
        %p193 = pneg %p73
      $region14: #{nanogpt_classifier.5} parent=11 // pred_check_branch
        %195 = sbr.rel (%p193) target = $region16
      $region15: #{nanogpt_classifier.5} parent=11 // pred_region
        _
      $region16: #{nanogpt_classifier.5} parent=11 // pred_fallthru
        _
      // Predicated region
      $region17: #{nanogpt_classifier.5} parent=11 // pred_check
        %p196 = pneg %p94
      $region18: #{nanogpt_classifier.5} parent=11 // pred_check_branch
        %198 = sbr.rel (%p196) target = $region20
      $region19: #{nanogpt_classifier.5} parent=11 // pred_region
        _
      $region20: #{nanogpt_classifier.5} parent=11 // pred_fallthru
        _
    $region12: #{nanogpt_classifier.5} parent=5 // pred_fallthru
      _
    %p199 = scmp.lt.s32.totalorder %s12, 2
    // Predicated region
    $region21: #{nanogpt_classifier.5} parent=5 // pred_check
      %p200 = pneg %p199
    $region22: #{nanogpt_classifier.5} parent=5 // pred_check_branch
      %202 = sbr.rel (%p200) target = $region24
    $region23: #{nanogpt_classifier.5} parent=5 // pred_region
      // Predicated region
      $region25: #{nanogpt_classifier.5} parent=23 // pred_check
        %p203 = pneg %p46
      $region26: #{nanogpt_classifier.5} parent=23 // pred_check_branch
        %205 = sbr.rel (%p203) target = $region28
      $region27: #{nanogpt_classifier.5} parent=23 // pred_region
        %p206 = scmp.lt.s32.totalorder %s19, 1
        %s207 = scalar_select %p206, %s19, 1
        %p208 = scmp.lt.s32.totalorder %s20, 0
        %s209 = scalar_select %p208, %s20, 0
        %s210 = sadd.s32 %s209, %s207
        %s211 = smul.addr %s210, 8
        %s212 = scalar_lea.vmem %s0, %s211
      $region28: #{nanogpt_classifier.5} parent=23 // pred_fallthru
        _
    $region24: #{nanogpt_classifier.5} parent=5 // pred_fallthru
      _
    %p213 = scmp.le.s32.totalorder 1, %s12
    %p214 = scmp.lt.s32.totalorder %s12, 3
    %p215 = pnand %p213, %p214
    %p216 = pneg %p215
    // Predicated region
    $region29: #{nanogpt_classifier.5} parent=5 // pred_check
      _
    $region30: #{nanogpt_classifier.5} parent=5 // pred_check_branch
      %218 = sbr.rel (%p215) target = $region32
    $region31: #{nanogpt_classifier.5} parent=5 // pred_region
      %s219 = ssub.s32 %s12, 1
      %p220 = scmp.lt.s32.totalorder %s21, 1
      %s221 = scalar_select %p220, %s21, 1
      %p222 = scmp.lt.s32.totalorder %s22, 0
      %s223 = scalar_select %p222, %s22, 0
      %s224 = sadd.s32 %s223, %s221
      %s225 = smul.addr %s224, 8
      %s226 = scalar_lea.vmem %s0, %s225
      %p227 = pneg %p52
      %p228 = pneg %p49
      %p229 = pneg %p73
      %p230 = pneg %p70
      %p231 = pneg %p94
      %p232 = pneg %p91
      %p233 = pneg %p122
      %p234 = pneg %p119
      %p235 = scmp.lt.s32.totalorder %s21, 1
      %s236 = scalar_select %p235, %s21, 1
      %p237 = scmp.lt.s32.totalorder %s22, 0
      %s238 = scalar_select %p237, %s22, 0
      %s239 = sadd.s32 %s238, %s236
      %s240 = smul.addr %s239, 4
      %s241 = scalar_lea.vmem %s3, %s240
      %p242 = pneg %p150
      %p243 = pneg %p147
      %p244 = scmp.lt.s32.totalorder %s21, 1
      %s245 = scalar_select %p244, %s21, 1
      %p246 = scmp.lt.s32.totalorder %s22, 0
      %s247 = scalar_select %p246, %s22, 0
      %s248 = sadd.s32 %s247, %s245
      %s249 = smul.addr %s248, 4
      %s250 = scalar_lea.vmem %s4, %s249
      %p251 = pneg %p178
      %p252 = pneg %p175
      %p253 = scmp.lt.s32.totalorder %s21, 1
      %s254 = scalar_select %p253, %s21, 1
      %p255 = scmp.lt.s32.totalorder %s22, 0
      %s256 = scalar_select %p255, %s22, 0
      %s257 = sadd.s32 %s256, %s254
      %s258 = smul.addr %s257, 4
      %s259 = scalar_lea.vmem %s5, %s258
      %p260 = scmp.lt.s32.totalorder %s21, 1
      %s261 = scalar_select %p260, %s21, 1
      %p262 = scmp.lt.s32.totalorder %s22, 0
      %s263 = scalar_select %p262, %s22, 0
      %s264 = sadd.s32 %s263, %s261
      %s265 = smul.addr %s264, 8
      %s266 = scalar_lea.vmem %s0, %s265
      %p267 = scmp.lt.s32.totalorder %s21, 1
      %s268 = scalar_select %p267, %s21, 1
      %p269 = scmp.lt.s32.totalorder %s22, 0
      %s270 = scalar_select %p269, %s22, 0
      %s271 = sadd.s32 %s270, %s268
      %s272 = smul.addr %s271, 4
      %s273 = scalar_lea.vmem %s3, %s272
      %p274 = scmp.lt.s32.totalorder %s21, 1
      %s275 = scalar_select %p274, %s21, 1
      %p276 = scmp.lt.s32.totalorder %s22, 0
      %s277 = scalar_select %p276, %s22, 0
      %s278 = sadd.s32 %s277, %s275
      %s279 = smul.addr %s278, 4
      %s280 = scalar_lea.vmem %s4, %s279
      %p281 = scmp.lt.s32.totalorder %s21, 1
      %s282 = scalar_select %p281, %s21, 1
      %p283 = scmp.lt.s32.totalorder %s22, 0
      %s284 = scalar_select %p283, %s22, 0
      %s285 = sadd.s32 %s284, %s282
      %s286 = smul.addr %s285, 4
      %s287 = scalar_lea.vmem %s5, %s286
      %v289 = vld [vmem:[%s266] sm:$0xff]
      %v290 = vpack.c.bf16 %v289, %v289
      %v291 = vld [vmem:[%s1] sm:$0xf]
      %v292 = vld [vmem:[%s1 + $0x4] sm:$0xf]
      %v293 = vld [vmem:[%s1 + $0x8] sm:$0xf]
      %v294 = vld [vmem:[%s1 + $0xc] sm:$0xf]
      %v295 = vld [vmem:[%s2] sm:$0x1]
      %v297 = vlaneseq
      %v298 = vshrl.u32 %v297, 7
      %v299 = vsub.s32 0, %v298
      %v300 = vrot.slane %v295, %v299
      %v306 = vunpack.c.l.b16 %v291
      %v307 = vunpack.c.l.b16 %v292
      %v308 = vunpack.c.l.b16 %v293
      %v309 = vunpack.c.l.b16 %v294
      %v310 = vpack.c.b16 %v307, %v306
      %v311 = vpack.c.b16 %v309, %v308
      %vm314 = vcmask 261120
      %v316 = vsel %vm314, %v290, 0
      %318 = vmatprep.subr.bf16.mxu0 0
      %319 = vmatpush1.bf16.msra.mxu0 0
      %320 = vmatprep.subr.bf16.mxu0 0
      %321 = vmatpush1.bf16.msra.mxu0 0
      %322 = vmatprep.subr.bf16.mxu0 0
      %323 = vmatpush1.bf16.msra.mxu0 0
      %324 = vmatprep.subr.bf16.mxu0 0
      %325 = vmatpush1.bf16.msra.mxu0 0
      %326 = vmatprep.subr.bf16.mxu0 0
      %327 = vmatpush1.bf16.msra.mxu0 0
      %328 = vmatprep.subr.bf16.mxu0 0
      %329 = vmatpush1.bf16.msra.mxu0 0
      %330 = vmatprep.subr.bf16.mxu0 0
      %331 = vmatpush1.bf16.msra.mxu0 %v311
      %332 = vmatprep.subr.bf16.mxu0 0
      %333 = vmatpush1.bf16.msra.mxu0 %v310
      %334 = vmatprep.subr.bf16.mxu0 0
      %335 = vmatpush2.bf16.msra.mxu0 0
      %336 = vmatprep.subr.bf16.mxu0 0
      %337 = vmatpush2.bf16.msra.mxu0 0
      %338 = vmatprep.subr.bf16.mxu0 0
      %339 = vmatpush2.bf16.msra.mxu0 0
      %340 = vmatprep.subr.bf16.mxu0 0
      %341 = vmatpush2.bf16.msra.mxu0 0
      %342 = vmatprep.subr.bf16.mxu0 0
      %343 = vmatpush2.bf16.msra.mxu0 0
      %344 = vmatprep.subr.bf16.mxu0 0
      %345 = vmatpush2.bf16.msra.mxu0 0
      %346 = vmatprep.subr.bf16.mxu0 0
      %347 = vmatpush2.bf16.msra.mxu0 0
      %348 = vmatprep.subr.bf16.mxu0 0
      %349 = vmatpush2.bf16.msra.mxu0 0
      %350 = vmatprep.mubr.bf16.mxu0 0
      %351 = vmatmul.mubr.bf16.gmra.mxu0 %v316
      %v352 = vpop.f32.mrf.mxu0
      %v353 = vadd.f32 %v300, %v352
      %v354 = vpop.f32.mrf.mxu0
      %v355 = vpop.f32.mrf.mxu0
      %v356 = vpop.f32.mrf.mxu0
      %357 = vdwg.mxu0
      %v358 = vpack.c.bf16 %v353, %v353
      %vm359 = vcmask 257024
      %360 = vst.msk [vmem:[%s273] sm:$0xf] %vm359, %v358
      %v362 = vunpack.c.l.b16 %v358
      %v363 = vpack.c.b16 %v362, %v362
      %364 = vrot.lane.b32.xlu0 %v363, 96
      %v365 = vpop.permute.xlu0 %364
      %367 = vst.msk [vmem:[%s280] sm:$0xf] %vm359, %v365
      %368 = vrot.lane.b32.xlu0 %v363, 64
      %v369 = vpop.permute.xlu0 %368
      %371 = vst.msk [vmem:[%s287] sm:$0xf] %vm359, %v369
      %p372 = scmp.lt.s32.totalorder %s21, 1
      %s373 = scalar_select %p372, %s21, 1
      %p374 = scmp.lt.s32.totalorder %s22, 0
      %s375 = scalar_select %p374, %s22, 0
      %s376 = sadd.s32 %s375, %s373
      %s377 = smul.addr %s376, 4
      %s378 = scalar_lea.vmem %s3, %s377
      %p379 = scmp.lt.s32.totalorder %s21, 1
      %s380 = scalar_select %p379, %s21, 1
      %p381 = scmp.lt.s32.totalorder %s22, 0
      %s382 = scalar_select %p381, %s22, 0
      %s383 = sadd.s32 %s382, %s380
      %s384 = smul.addr %s383, 4
      %s385 = scalar_lea.vmem %s4, %s384
      %p386 = scmp.lt.s32.totalorder %s21, 1
      %s387 = scalar_select %p386, %s21, 1
      %p388 = scmp.lt.s32.totalorder %s22, 0
      %s389 = scalar_select %p388, %s22, 0
      %s390 = sadd.s32 %s389, %s387
      %s391 = smul.addr %s390, 4
      %s392 = scalar_lea.vmem %s5, %s391
      // Predicated region
      $region33: #{nanogpt_classifier.5} parent=31 // pred_check
        %p393 = pneg %p119
      $region34: #{nanogpt_classifier.5} parent=31 // pred_check_branch
        %395 = sbr.rel (%p393) target = $region36
      $region35: #{nanogpt_classifier.5} parent=31 // pred_region
        _
      $region36: #{nanogpt_classifier.5} parent=31 // pred_fallthru
        _
      // Predicated region
      $region37: #{nanogpt_classifier.5} parent=31 // pred_check
        %p396 = pneg %p147
      $region38: #{nanogpt_classifier.5} parent=31 // pred_check_branch
        %398 = sbr.rel (%p396) target = $region40
      $region39: #{nanogpt_classifier.5} parent=31 // pred_region
        _
      $region40: #{nanogpt_classifier.5} parent=31 // pred_fallthru
        _
      // Predicated region
      $region41: #{nanogpt_classifier.5} parent=31 // pred_check
        %p399 = pneg %p175
      $region42: #{nanogpt_classifier.5} parent=31 // pred_check_branch
        %401 = sbr.rel (%p399) target = $region44
      $region43: #{nanogpt_classifier.5} parent=31 // pred_region
        _
      $region44: #{nanogpt_classifier.5} parent=31 // pred_fallthru
        _
    $region32: #{nanogpt_classifier.5} parent=5 // pred_fallthru
      _
    %p402 = scmp.le.s32.totalorder 2, %s12
    // Predicated region
    $region45: #{nanogpt_classifier.5} parent=5 // pred_check
      %p403 = pneg %p402
    $region46: #{nanogpt_classifier.5} parent=5 // pred_check_branch
      %405 = sbr.rel (%p403) target = $region48
    $region47: #{nanogpt_classifier.5} parent=5 // pred_region
      %s406 = ssub.s32 %s12, 2
      // Predicated region
      $region49: #{nanogpt_classifier.5} parent=47 // pred_check
        %p407 = pneg %p125
      $region50: #{nanogpt_classifier.5} parent=47 // pred_check_branch
        %409 = sbr.rel (%p407) target = $region52
      $region51: #{nanogpt_classifier.5} parent=47 // pred_region
        %p410 = scmp.lt.s32.totalorder %s23, 1
        %s411 = scalar_select %p410, %s23, 1
        %p412 = scmp.lt.s32.totalorder %s24, 0
        %s413 = scalar_select %p412, %s24, 0
        %s414 = sadd.s32 %s413, %s411
        %s415 = smul.addr %s414, 4
        %s416 = scalar_lea.vmem %s3, %s415
      $region52: #{nanogpt_classifier.5} parent=47 // pred_fallthru
        _
      // Predicated region
      $region53: #{nanogpt_classifier.5} parent=47 // pred_check
        %p417 = pneg %p153
      $region54: #{nanogpt_classifier.5} parent=47 // pred_check_branch
        %419 = sbr.rel (%p417) target = $region56
      $region55: #{nanogpt_classifier.5} parent=47 // pred_region
        %p420 = scmp.lt.s32.totalorder %s23, 1
        %s421 = scalar_select %p420, %s23, 1
        %p422 = scmp.lt.s32.totalorder %s24, 0
        %s423 = scalar_select %p422, %s24, 0
        %s424 = sadd.s32 %s423, %s421
        %s425 = smul.addr %s424, 4
        %s426 = scalar_lea.vmem %s4, %s425
      $region56: #{nanogpt_classifier.5} parent=47 // pred_fallthru
        _
      // Predicated region
      $region57: #{nanogpt_classifier.5} parent=47 // pred_check
        %p427 = pneg %p181
      $region58: #{nanogpt_classifier.5} parent=47 // pred_check_branch
        %429 = sbr.rel (%p427) target = $region60
      $region59: #{nanogpt_classifier.5} parent=47 // pred_region
        %p430 = scmp.lt.s32.totalorder %s23, 1
        %s431 = scalar_select %p430, %s23, 1
        %p432 = scmp.lt.s32.totalorder %s24, 0
        %s433 = scalar_select %p432, %s24, 0
        %s434 = sadd.s32 %s433, %s431
        %s435 = smul.addr %s434, 4
        %s436 = scalar_lea.vmem %s5, %s435
      $region60: #{nanogpt_classifier.5} parent=47 // pred_fallthru
        _
    $region48: #{nanogpt_classifier.5} parent=5 // pred_fallthru
      _
  $region6: #{nanogpt_classifier.5} parent=0 // loop_footer
    %s16 = sadd.s32 1, %s12
  $region7: #{nanogpt_classifier.5} parent=0 // loop_footer_branch
    %11 = sbr.rel target = $region3
  $region8: #{nanogpt_classifier.5} parent=0 // loop_exit
    _

// kernel: nanogpt_classifier.9
$region0: #{nanogpt_classifier.9}
  #allocation0 [shape = 'u32[]', space=smem, size = 0x4, offset = 0x4, fixed_abs, tag = 'smem constant byte address 0x4 - core index']
  #allocation1 [shape = 'u32[144,128]{1,0:T(1,128)}', space=vmem, size = 0x12000, scoped, tag = 'internal scratch']
  %s0 = inlined_call_operand.vmem [shape: f32[2,32], index: 0, kind: input, shape index: {}]
  %s1 = inlined_call_operand.vmem [shape: f32[1,32], index: 1, kind: input, shape index: {}]
  %s2 = inlined_call_operand.vmem [shape: f32[1,32], index: 2, kind: input, shape index: {}]
  %s3 = inlined_call_operand.vmem [shape: bf16[32,2], index: 3, kind: input, shape index: {}]
  %s4 = inlined_call_operand.vmem [shape: f32[1,2], index: 4, kind: input, shape index: {}]
  %s5 = inlined_call_operand.hbm [shape: f32[2,2], index: 5, kind: output, shape index: {}]
  %s6 = sld [smem:[#allocation0]]
  $region30: #{nanogpt_classifier.9} parent=0
    _
  %s8 = ssub.s32 1, %s6
  %s9 = scalar_select 0, %s8, %s6
  $region1: #{nanogpt_classifier.9} parent=0
    #allocation2 [shape = 'u8[1024]{0}', space=vmem, size = 0x400, scoped, tag = 'output window, operand 0, single buffered']
    #allocation3 [shape = 's32[1]{0}', space=sflag, size = 0x4, scoped, tag = 'scoped memory for nanogpt_classifier.9']
    %10 = vsyncpa [#allocation3], 0
    // Predicated region
    $region2: #{nanogpt_classifier.9} parent=1 // pred_check
      _
    $region3: #{nanogpt_classifier.9} parent=1 // pred_check_branch
      %12 = sbr.rel (0) target = $region5
    $region4: #{nanogpt_classifier.9} parent=1 // pred_region
      _
    $region5: #{nanogpt_classifier.9} parent=1 // pred_fallthru
      _
    // Predicated region
    $region6: #{nanogpt_classifier.9} parent=1 // pred_check
      _
    $region7: #{nanogpt_classifier.9} parent=1 // pred_check_branch
      %14 = sbr.rel (0) target = $region9
    $region8: #{nanogpt_classifier.9} parent=1 // pred_region
      _
    $region9: #{nanogpt_classifier.9} parent=1 // pred_fallthru
      _
    // Predicated region
    $region10: #{nanogpt_classifier.9} parent=1 // pred_check
      _
    $region11: #{nanogpt_classifier.9} parent=1 // pred_check_branch
      %16 = sbr.rel (0) target = $region13
    $region12: #{nanogpt_classifier.9} parent=1 // pred_region
      _
    $region13: #{nanogpt_classifier.9} parent=1 // pred_fallthru
      _
    // Predicated region
    $region14: #{nanogpt_classifier.9} parent=1 // pred_check
      _
    $region15: #{nanogpt_classifier.9} parent=1 // pred_check_branch
      %18 = sbr.rel (0) target = $region17
    $region16: #{nanogpt_classifier.9} parent=1 // pred_region
      _
    $region17: #{nanogpt_classifier.9} parent=1 // pred_fallthru
      _
    // Predicated region
    $region18: #{nanogpt_classifier.9} parent=1 // pred_check
      _
    $region19: #{nanogpt_classifier.9} parent=1 // pred_check_branch
      %20 = sbr.rel (0) target = $region21
    $region20: #{nanogpt_classifier.9} parent=1 // pred_region
      _
    $region21: #{nanogpt_classifier.9} parent=1 // pred_fallthru
      _
    %v22 = vld [vmem:[%s0] sm:$0x3]
    %v23 = vld [vmem:[%s1] sm:$0x1]
    %v24 = vld [vmem:[%s2] sm:$0x1]
    %vm25 = vcmask 254976
    %v26 = vsel %vm25, %v22, 0.0
    %27 = vadd.xlane.f32.xlu0 %v26
    %v28 = vpop.xlane.xlu0 %27
    %v29 = vrcp.pop 32.0
    %v30 = vmul.f32 %v28, %v29
    %v31 = vsub.f32 %v22, %v30
    %v32 = vmul.f32 %v31, %v31
    %v33 = vsel %vm25, %v32, 0.0
    %34 = vadd.xlane.f32.xlu0 %v33
    %v35 = vpop.xlane.xlu0 %34
    %v36 = vmul.f32 %v35, %v29
    %v37 = vadd.f32 %v36, 1e-05
    %v38 = vrsqrt.pop %v37
    %v39 = vmul.f32 %v31, %v38
    %v41 = vlaneseq
    %v42 = vshrl.u32 %v41, 7
    %v43 = vsub.s32 0, %v42
    %v44 = vrot.slane %v23, %v43
    %v46 = vmul.f32 %v39, %v44
    %v48 = vlaneseq
    %v49 = vshrl.u32 %v48, 7
    %v50 = vsub.s32 0, %v49
    %v51 = vrot.slane %v24, %v50
    %v53 = vadd.f32 %v46, %v51
    %v54 = vpack.c.bf16 %v53, %v53
    %v55 = vld [vmem:[%s3] sm:$0xf]
    %v56 = vld [vmem:[%s3 + $0x4] sm:$0xf]
    %v57 = vld [vmem:[%s3 + $0x8] sm:$0xf]
    %v58 = vld [vmem:[%s3 + $0xc] sm:$0xf]
    %v59 = vld [vmem:[%s4] sm:$0x1]
    %v61 = vlaneseq
    %v62 = vshrl.u32 %v61, 7
    %v63 = vsub.s32 0, %v62
    %v64 = vrot.slane %v59, %v63
    %v70 = vunpack.c.l.b16 %v55
    %v71 = vunpack.c.l.b16 %v56
    %v72 = vunpack.c.l.b16 %v57
    %v73 = vunpack.c.l.b16 %v58
    %v74 = vpack.c.b16 %v71, %v70
    %v75 = vpack.c.b16 %v73, %v72
    %vm78 = vcmask 261120
    %v80 = vsel %vm78, %v54, 0
    %82 = vmatprep.subr.bf16.mxu0 0
    %83 = vmatpush1.bf16.msra.mxu0 0
    %84 = vmatprep.subr.bf16.mxu0 0
    %85 = vmatpush1.bf16.msra.mxu0 0
    %86 = vmatprep.subr.bf16.mxu0 0
    %87 = vmatpush1.bf16.msra.mxu0 0
    %88 = vmatprep.subr.bf16.mxu0 0
    %89 = vmatpush1.bf16.msra.mxu0 0
    %90 = vmatprep.subr.bf16.mxu0 0
    %91 = vmatpush1.bf16.msra.mxu0 0
    %92 = vmatprep.subr.bf16.mxu0 0
    %93 = vmatpush1.bf16.msra.mxu0 0
    %94 = vmatprep.subr.bf16.mxu0 0
    %95 = vmatpush1.bf16.msra.mxu0 %v75
    %96 = vmatprep.subr.bf16.mxu0 0
    %97 = vmatpush1.bf16.msra.mxu0 %v74
    %98 = vmatprep.subr.bf16.mxu0 0
    %99 = vmatpush2.bf16.msra.mxu0 0
    %100 = vmatprep.subr.bf16.mxu0 0
    %101 = vmatpush2.bf16.msra.mxu0 0
    %102 = vmatprep.subr.bf16.mxu0 0
    %103 = vmatpush2.bf16.msra.mxu0 0
    %104 = vmatprep.subr.bf16.mxu0 0
    %105 = vmatpush2.bf16.msra.mxu0 0
    %106 = vmatprep.subr.bf16.mxu0 0
    %107 = vmatpush2.bf16.msra.mxu0 0
    %108 = vmatprep.subr.bf16.mxu0 0
    %109 = vmatpush2.bf16.msra.mxu0 0
    %110 = vmatprep.subr.bf16.mxu0 0
    %111 = vmatpush2.bf16.msra.mxu0 0
    %112 = vmatprep.subr.bf16.mxu0 0
    %113 = vmatpush2.bf16.msra.mxu0 0
    %114 = vmatprep.mubr.bf16.mxu0 0
    %115 = vmatmul.mubr.bf16.gmra.mxu0 %v80
    %v116 = vpop.f32.mrf.mxu0
    %v117 = vadd.f32 %v64, %v116
    %v118 = vpop.f32.mrf.mxu0
    %v119 = vpop.f32.mrf.mxu0
    %v120 = vpop.f32.mrf.mxu0
    %121 = vdwg.mxu0
    %vm122 = vcmask 9216
    %123 = vst.msk [vmem:[#allocation2] sm:$0x3] %vm122, %v117
    // Predicated region
    $region22: #{nanogpt_classifier.9} parent=1 // pred_check
      _
    $region23: #{nanogpt_classifier.9} parent=1 // pred_check_branch
      %125 = sbr.rel (0) target = $region25
    $region24: #{nanogpt_classifier.9} parent=1 // pred_region
      %s127 = ssub.s32 32, 32
      %128 = vsyncadd [#allocation3], %s127
      %s130 = sshll.u32 [#allocation2], 4
      %s131 = int_to_ptr.vmem [resolvable:$true] %s130
      %133 = dma.vmem_to_hbm [thread:$0]  %s131, 32, %s5, [#allocation3]
    $region25: #{nanogpt_classifier.9} parent=1 // pred_fallthru
      _
    // Predicated region
    $region26: #{nanogpt_classifier.9} parent=1 // pred_check
      _
    $region27: #{nanogpt_classifier.9} parent=1 // pred_check_branch
      %135 = sbr.rel (0) target = $region29
    $region28: #{nanogpt_classifier.9} parent=1 // pred_region
      %136 = dma.done [#allocation3], 32
    $region29: #{nanogpt_classifier.9} parent=1 // pred_fallthru
      _
    %137 = vsyncpa [#allocation3], 1

// kernel: nanogpt_classifier.6
$region0: #{nanogpt_classifier.6}
  #allocation0 [shape = 'u32[]', space=smem, size = 0x4, offset = 0x4, fixed_abs, tag = 'smem constant byte address 0x4 - core index']
  #allocation1 [shape = 'u32[144,128]{1,0:T(1,128)}', space=vmem, size = 0x12000, scoped, tag = 'internal scratch']
  #allocation2 [shape = 'f32[4,8,1]{2,1,0:T(8,128)}', space=vmem, size = 0x4000, scoped, tag = 'scratch operand']
  #allocation3 [shape = 'f32[4,8,1]{2,1,0:T(8,128)}', space=vmem, size = 0x4000, scoped, tag = 'scratch operand']
  #allocation4 [shape = 'f32[4,8,8]{2,1,0:T(8,128)}', space=vmem, size = 0x4000, scoped, tag = 'scratch operand']
  %s0 = inlined_call_operand.vmem [shape: f32[2,8,32], index: 0, kind: input, shape index: {}]
  %s1 = inlined_call_operand.vmem [shape: bf16[2,4,8,8], index: 1, kind: input, shape index: {}]
  %s2 = inlined_call_operand.vmem [shape: bf16[2,4,8,8], index: 2, kind: input, shape index: {}]
  %s3 = inlined_call_operand.vmem [shape: bf16[2,4,8,8], index: 3, kind: input, shape index: {}]
  %s4 = inlined_call_operand.vmem [shape: bf16[4,8,32], index: 4, kind: input, shape index: {}]
  %s5 = inlined_call_operand.vmem [shape: f32[1,32], index: 5, kind: input, shape index: {}]
  %s6 = inlined_call_operand.vmem [shape: f32[1,32], index: 6, kind: input, shape index: {}]
  %s7 = inlined_call_operand.vmem [shape: f32[1,32], index: 7, kind: input, shape index: {}]
  %s8 = inlined_call_operand.vmem [shape: bf16[32,128], index: 8, kind: input, shape index: {}]
  %s9 = inlined_call_operand.vmem [shape: f32[1,128], index: 9, kind: input, shape index: {}]
  %s10 = inlined_call_operand.vmem [shape: bf16[128,32], index: 10, kind: input, shape index: {}]
  %s11 = inlined_call_operand.vmem [shape: f32[1,32], index: 11, kind: input, shape index: {}]
  %s12 = inlined_call_operand.vmem [shape: f32[1,32], index: 12, kind: input, shape index: {}]
  %s13 = inlined_call_operand.vmem [shape: f32[1,32], index: 13, kind: input, shape index: {}]
  %s14 = inlined_call_operand.vmem [shape: f32[2,8,32], index: 14, kind: output, shape index: {}]
  %s15 = sld [smem:[#allocation0]]
  $region97: #{nanogpt_classifier.6} parent=0
    _
  %s17 = ssub.s32 1, %s15
  %s18 = scalar_select 0, %s17, %s15
  loop: start=0, step=1, limit=4
  $region2: #{nanogpt_classifier.6} parent=0 // loop_pre_header
    _
  $region3: #{nanogpt_classifier.6} parent=0 // loop_header
    %s20 = sphi 0, %s24
    %p21 = scmp.ge.s32.totalorder %s20, 4
    %s27 = sphi 0, %s46
    %s28 = sphi 0, %s42
    %s29 = sphi 0, %s38
    %s30 = sphi 0, %s27
    %s31 = sphi 0, %s28
    %s32 = sphi 0, %s29
    %s33 = sphi 0, %s30
    %s34 = sphi 0, %s31
    %s35 = sphi 0, %s32
    %s51 = sphi 0, %s53
    %s54 = sphi 0, %s51
    %s55 = sphi 0, %s54
    %s71 = sphi 0, %s55
    %s79 = sphi 0, %s81
    %s82 = sphi 0, %s79
    %s83 = sphi 0, %s82
    %s99 = sphi 0, %s83
    %s107 = sphi 0, %s109
    %s110 = sphi 0, %s107
    %s111 = sphi 0, %s110
    %s127 = sphi 0, %s111
    %s135 = sphi 0, %s137
    %s138 = sphi 0, %s135
    %s139 = sphi 0, %s138
    %s155 = sphi 0, %s139
    %s159 = sphi 0, %s159
    %s161 = sphi 0, %s159
    %s162 = sphi 0, %s161
    %s176 = sphi 0, %s162
    %s180 = sphi 0, %s180
    %s182 = sphi 0, %s180
    %s183 = sphi 0, %s182
    %s197 = sphi 0, %s183
    %s201 = sphi 0, %s201
    %s203 = sphi 0, %s201
    %s204 = sphi 0, %s203
    %s218 = sphi 0, %s204
    %s222 = sphi 0, %s222
    %s224 = sphi 0, %s222
    %s225 = sphi 0, %s224
    %s239 = sphi 0, %s225
    %s243 = sphi 0, %s243
    %s245 = sphi 0, %s243
    %s246 = sphi 0, %s245
    %s260 = sphi 0, %s246
    %s264 = sphi 0, %s264
    %s266 = sphi 0, %s264
    %s267 = sphi 0, %s266
    %s281 = sphi 0, %s267
    %s285 = sphi 0, %s285
    %s287 = sphi 0, %s285
    %s288 = sphi 0, %s287
    %s302 = sphi 0, %s288
    %s306 = sphi 0, %s306
    %s308 = sphi 0, %s306
    %s309 = sphi 0, %s308
    %s323 = sphi 0, %s309
    %s327 = sphi 0, %s327
    %s329 = sphi 0, %s327
    %s330 = sphi 0, %s329
    %s344 = sphi 0, %s330
    %s348 = sphi 0, %s348
    %s350 = sphi 0, %s348
    %s351 = sphi 0, %s350
    %s365 = sphi 0, %s351
    %s373 = sphi 0, %s375
    %s376 = sphi 0, %s373
    %s377 = sphi 0, %s376
    %s393 = sphi 0, %s377
  $region4: #{nanogpt_classifier.6} parent=0 // loop_header_branch
    %23 = sbr.rel (%p21) target = $region8
  $region5: #{nanogpt_classifier.6} parent=0 // loop_body
    %s25 = ssub.s32 %s20, 1
    %s26 = ssub.s32 %s20, 2
    %s36 = sadd.s32 1, %s29
    %p37 = scmp.ge.s32.totalorder %s36, 1
    %s38 = scalar_select %p37, 0, %s36
    %s39 = sadd.s32 1, %s28
    %s40 = scalar_select %p37, %s39, %s28
    %p41 = scmp.ge.s32.totalorder %s40, 1
    %s42 = scalar_select %p41, 0, %s40
    %s43 = sadd.s32 1, %s27
    %s44 = scalar_select %p41, %s43, %s27
    %p45 = scmp.ge.s32.totalorder %s44, 2
    %s46 = scalar_select %p45, 0, %s44
    %s47 = ssub.s32 %s27, %s46
    %s48 = ssub.s32 %s28, %s42
    %s49 = sor.u32 %s47, %s48
    %p50 = scmp.eq.s32.totalorder %s49, 0
    %s52 = sadd.s32 %s51, 1
    %s53 = scalar_select %p50, %s51, %s52
    %p56 = pneg %p50
    %p57 = scmp.eq.s32.totalorder %s20, 1
    %p58 = por %p56, %p57
    %p59 = scmp.ne.s32.totalorder %s51, %s54
    %p60 = scmp.eq.s32.totalorder %s20, 0
    %p61 = por %p59, %p60
    %p62 = scmp.ne.s32.totalorder %s51, %s54
    %p63 = scmp.eq.s32.totalorder %s25, 1
    %p64 = por %p62, %p63
    %p65 = scmp.ne.s32.totalorder %s54, %s55
    %p66 = scmp.eq.s32.totalorder %s25, 0
    %p67 = por %p65, %p66
    %p68 = scmp.ne.s32.totalorder %s54, %s55
    %p69 = scmp.eq.s32.totalorder %s26, 1
    %p70 = por %p68, %p69
    %p72 = scmp.ne.s32.totalorder %s55, %s71
    %p73 = scmp.eq.s32.totalorder %s26, 0
    %p74 = por %p72, %p73
    %s75 = ssub.s32 %s27, %s46
    %s76 = ssub.s32 %s28, %s42
    %s77 = sor.u32 %s75, %s76
    %p78 = scmp.eq.s32.totalorder %s77, 0
    %s80 = sadd.s32 %s79, 1
    %s81 = scalar_select %p78, %s79, %s80
    %p84 = pneg %p78
    %p85 = scmp.eq.s32.totalorder %s20, 1
    %p86 = por %p84, %p85
    %p87 = scmp.ne.s32.totalorder %s79, %s82
    %p88 = scmp.eq.s32.totalorder %s20, 0
    %p89 = por %p87, %p88
    %p90 = scmp.ne.s32.totalorder %s79, %s82
    %p91 = scmp.eq.s32.totalorder %s25, 1
    %p92 = por %p90, %p91
    %p93 = scmp.ne.s32.totalorder %s82, %s83
    %p94 = scmp.eq.s32.totalorder %s25, 0
    %p95 = por %p93, %p94
    %p96 = scmp.ne.s32.totalorder %s82, %s83
    %p97 = scmp.eq.s32.totalorder %s26, 1
    %p98 = por %p96, %p97
    %p100 = scmp.ne.s32.totalorder %s83, %s99
    %p101 = scmp.eq.s32.totalorder %s26, 0
    %p102 = por %p100, %p101
    %s103 = ssub.s32 %s27, %s46
    %s104 = ssub.s32 %s29, %s38
    %s105 = sor.u32 %s103, %s104
    %p106 = scmp.eq.s32.totalorder %s105, 0
    %s108 = sadd.s32 %s107, 1
    %s109 = scalar_select %p106, %s107, %s108
    %p112 = pneg %p106
    %p113 = scmp.eq.s32.totalorder %s20, 1
    %p114 = por %p112, %p113
    %p115 = scmp.ne.s32.totalorder %s107, %s110
    %p116 = scmp.eq.s32.totalorder %s20, 0
    %p117 = por %p115, %p116
    %p118 = scmp.ne.s32.totalorder %s107, %s110
    %p119 = scmp.eq.s32.totalorder %s25, 1
    %p120 = por %p118, %p119
    %p121 = scmp.ne.s32.totalorder %s110, %s111
    %p122 = scmp.eq.s32.totalorder %s25, 0
    %p123 = por %p121, %p122
    %p124 = scmp.ne.s32.totalorder %s110, %s111
    %p125 = scmp.eq.s32.totalorder %s26, 1
    %p126 = por %p124, %p125
    %p128 = scmp.ne.s32.totalorder %s111, %s127
    %p129 = scmp.eq.s32.totalorder %s26, 0
    %p130 = por %p128, %p129
    %s131 = ssub.s32 %s27, %s46
    %s132 = ssub.s32 %s29, %s38
    %s133 = sor.u32 %s131, %s132
    %p134 = scmp.eq.s32.totalorder %s133, 0
    %s136 = sadd.s32 %s135, 1
    %s137 = scalar_select %p134, %s135, %s136
    %p140 = pneg %p134
    %p141 = scmp.eq.s32.totalorder %s20, 1
    %p142 = por %p140, %p141
    %p143 = scmp.ne.s32.totalorder %s135, %s138
    %p144 = scmp.eq.s32.totalorder %s20, 0
    %p145 = por %p143, %p144
    %p146 = scmp.ne.s32.totalorder %s135, %s138
    %p147 = scmp.eq.s32.totalorder %s25, 1
    %p148 = por %p146, %p147
    %p149 = scmp.ne.s32.totalorder %s138, %s139
    %p150 = scmp.eq.s32.totalorder %s25, 0
    %p151 = por %p149, %p150
    %p152 = scmp.ne.s32.totalorder %s138, %s139
    %p153 = scmp.eq.s32.totalorder %s26, 1
    %p154 = por %p152, %p153
    %p156 = scmp.ne.s32.totalorder %s139, %s155
    %p157 = scmp.eq.s32.totalorder %s26, 0
    %p158 = por %p156, %p157
    %s160 = sadd.s32 %s159, 1
    %p163 = scmp.eq.s32.totalorder %s20, 1
    %p164 = scmp.ne.s32.totalorder %s159, %s161
    %p165 = scmp.eq.s32.totalorder %s20, 0
    %p166 = por %p164, %p165
    %p167 = scmp.ne.s32.totalorder %s159, %s161
    %p168 = scmp.eq.s32.totalorder %s25, 1
    %p169 = por %p167, %p168
    %p170 = scmp.ne.s32.totalorder %s161, %s162
    %p171 = scmp.eq.s32.totalorder %s25, 0
    %p172 = por %p170, %p171
    %p173 = scmp.ne.s32.totalorder %s161, %s162
    %p174 = scmp.eq.s32.totalorder %s26, 1
    %p175 = por %p173, %p174
    %p177 = scmp.ne.s32.totalorder %s162, %s176
    %p178 = scmp.eq.s32.totalorder %s26, 0
    %p179 = por %p177, %p178
    %s181 = sadd.s32 %s180, 1
    %p184 = scmp.eq.s32.totalorder %s20, 1
    %p185 = scmp.ne.s32.totalorder %s180, %s182
    %p186 = scmp.eq.s32.totalorder %s20, 0
    %p187 = por %p185, %p186
    %p188 = scmp.ne.s32.totalorder %s180, %s182
    %p189 = scmp.eq.s32.totalorder %s25, 1
    %p190 = por %p188, %p189
    %p191 = scmp.ne.s32.totalorder %s182, %s183
    %p192 = scmp.eq.s32.totalorder %s25, 0
    %p193 = por %p191, %p192
    %p194 = scmp.ne.s32.totalorder %s182, %s183
    %p195 = scmp.eq.s32.totalorder %s26, 1
    %p196 = por %p194, %p195
    %p198 = scmp.ne.s32.totalorder %s183, %s197
    %p199 = scmp.eq.s32.totalorder %s26, 0
    %p200 = por %p198, %p199
    %s202 = sadd.s32 %s201, 1
    %p205 = scmp.eq.s32.totalorder %s20, 1
    %p206 = scmp.ne.s32.totalorder %s201, %s203
    %p207 = scmp.eq.s32.totalorder %s20, 0
    %p208 = por %p206, %p207
    %p209 = scmp.ne.s32.totalorder %s201, %s203
    %p210 = scmp.eq.s32.totalorder %s25, 1
    %p211 = por %p209, %p210
    %p212 = scmp.ne.s32.totalorder %s203, %s204
    %p213 = scmp.eq.s32.totalorder %s25, 0
    %p214 = por %p212, %p213
    %p215 = scmp.ne.s32.totalorder %s203, %s204
    %p216 = scmp.eq.s32.totalorder %s26, 1
    %p217 = por %p215, %p216
    %p219 = scmp.ne.s32.totalorder %s204, %s218
    %p220 = scmp.eq.s32.totalorder %s26, 0
    %p221 = por %p219, %p220
    %s223 = sadd.s32 %s222, 1
    %p226 = scmp.eq.s32.totalorder %s20, 1
    %p227 = scmp.ne.s32.totalorder %s222, %s224
    %p228 = scmp.eq.s32.totalorder %s20, 0
    %p229 = por %p227, %p228
    %p230 = scmp.ne.s32.totalorder %s222, %s224
    %p231 = scmp.eq.s32.totalorder %s25, 1
    %p232 = por %p230, %p231
    %p233 = scmp.ne.s32.totalorder %s224, %s225
    %p234 = scmp.eq.s32.totalorder %s25, 0
    %p235 = por %p233, %p234
    %p236 = scmp.ne.s32.totalorder %s224, %s225
    %p237 = scmp.eq.s32.totalorder %s26, 1
    %p238 = por %p236, %p237
    %p240 = scmp.ne.s32.totalorder %s225, %s239
    %p241 = scmp.eq.s32.totalorder %s26, 0
    %p242 = por %p240, %p241
    %s244 = sadd.s32 %s243, 1
    %p247 = scmp.eq.s32.totalorder %s20, 1
    %p248 = scmp.ne.s32.totalorder %s243, %s245
    %p249 = scmp.eq.s32.totalorder %s20, 0
    %p250 = por %p248, %p249
    %p251 = scmp.ne.s32.totalorder %s243, %s245
    %p252 = scmp.eq.s32.totalorder %s25, 1
    %p253 = por %p251, %p252
    %p254 = scmp.ne.s32.totalorder %s245, %s246
    %p255 = scmp.eq.s32.totalorder %s25, 0
    %p256 = por %p254, %p255
    %p257 = scmp.ne.s32.totalorder %s245, %s246
    %p258 = scmp.eq.s32.totalorder %s26, 1
    %p259 = por %p257, %p258
    %p261 = scmp.ne.s32.totalorder %s246, %s260
    %p262 = scmp.eq.s32.totalorder %s26, 0
    %p263 = por %p261, %p262
    %s265 = sadd.s32 %s264, 1
    %p268 = scmp.eq.s32.totalorder %s20, 1
    %p269 = scmp.ne.s32.totalorder %s264, %s266
    %p270 = scmp.eq.s32.totalorder %s20, 0
    %p271 = por %p269, %p270
    %p272 = scmp.ne.s32.totalorder %s264, %s266
    %p273 = scmp.eq.s32.totalorder %s25, 1
    %p274 = por %p272, %p273
    %p275 = scmp.ne.s32.totalorder %s266, %s267
    %p276 = scmp.eq.s32.totalorder %s25, 0
    %p277 = por %p275, %p276
    %p278 = scmp.ne.s32.totalorder %s266, %s267
    %p279 = scmp.eq.s32.totalorder %s26, 1
    %p280 = por %p278, %p279
    %p282 = scmp.ne.s32.totalorder %s267, %s281
    %p283 = scmp.eq.s32.totalorder %s26, 0
    %p284 = por %p282, %p283
    %s286 = sadd.s32 %s285, 1
    %p289 = scmp.eq.s32.totalorder %s20, 1
    %p290 = scmp.ne.s32.totalorder %s285, %s287
    %p291 = scmp.eq.s32.totalorder %s20, 0
    %p292 = por %p290, %p291
    %p293 = scmp.ne.s32.totalorder %s285, %s287
    %p294 = scmp.eq.s32.totalorder %s25, 1
    %p295 = por %p293, %p294
    %p296 = scmp.ne.s32.totalorder %s287, %s288
    %p297 = scmp.eq.s32.totalorder %s25, 0
    %p298 = por %p296, %p297
    %p299 = scmp.ne.s32.totalorder %s287, %s288
    %p300 = scmp.eq.s32.totalorder %s26, 1
    %p301 = por %p299, %p300
    %p303 = scmp.ne.s32.totalorder %s288, %s302
    %p304 = scmp.eq.s32.totalorder %s26, 0
    %p305 = por %p303, %p304
    %s307 = sadd.s32 %s306, 1
    %p310 = scmp.eq.s32.totalorder %s20, 1
    %p311 = scmp.ne.s32.totalorder %s306, %s308
    %p312 = scmp.eq.s32.totalorder %s20, 0
    %p313 = por %p311, %p312
    %p314 = scmp.ne.s32.totalorder %s306, %s308
    %p315 = scmp.eq.s32.totalorder %s25, 1
    %p316 = por %p314, %p315
    %p317 = scmp.ne.s32.totalorder %s308, %s309
    %p318 = scmp.eq.s32.totalorder %s25, 0
    %p319 = por %p317, %p318
    %p320 = scmp.ne.s32.totalorder %s308, %s309
    %p321 = scmp.eq.s32.totalorder %s26, 1
    %p322 = por %p320, %p321
    %p324 = scmp.ne.s32.totalorder %s309, %s323
    %p325 = scmp.eq.s32.totalorder %s26, 0
    %p326 = por %p324, %p325
    %s328 = sadd.s32 %s327, 1
    %p331 = scmp.eq.s32.totalorder %s20, 1
    %p332 = scmp.ne.s32.totalorder %s327, %s329
    %p333 = scmp.eq.s32.totalorder %s20, 0
    %p334 = por %p332, %p333
    %p335 = scmp.ne.s32.totalorder %s327, %s329
    %p336 = scmp.eq.s32.totalorder %s25, 1
    %p337 = por %p335, %p336
    %p338 = scmp.ne.s32.totalorder %s329, %s330
    %p339 = scmp.eq.s32.totalorder %s25, 0
    %p340 = por %p338, %p339
    %p341 = scmp.ne.s32.totalorder %s329, %s330
    %p342 = scmp.eq.s32.totalorder %s26, 1
    %p343 = por %p341, %p342
    %p345 = scmp.ne.s32.totalorder %s330, %s344
    %p346 = scmp.eq.s32.totalorder %s26, 0
    %p347 = por %p345, %p346
    %s349 = sadd.s32 %s348, 1
    %p352 = scmp.eq.s32.totalorder %s20, 1
    %p353 = scmp.ne.s32.totalorder %s348, %s350
    %p354 = scmp.eq.s32.totalorder %s20, 0
    %p355 = por %p353, %p354
    %p356 = scmp.ne.s32.totalorder %s348, %s350
    %p357 = scmp.eq.s32.totalorder %s25, 1
    %p358 = por %p356, %p357
    %p359 = scmp.ne.s32.totalorder %s350, %s351
    %p360 = scmp.eq.s32.totalorder %s25, 0
    %p361 = por %p359, %p360
    %p362 = scmp.ne.s32.totalorder %s350, %s351
    %p363 = scmp.eq.s32.totalorder %s26, 1
    %p364 = por %p362, %p363
    %p366 = scmp.ne.s32.totalorder %s351, %s365
    %p367 = scmp.eq.s32.totalorder %s26, 0
    %p368 = por %p366, %p367
    %s369 = ssub.s32 %s27, %s46
    %s370 = ssub.s32 %s28, %s42
    %s371 = sor.u32 %s369, %s370
    %p372 = scmp.eq.s32.totalorder %s371, 0
    %s374 = sadd.s32 %s373, 1
    %s375 = scalar_select %p372, %s373, %s374
    %p378 = pneg %p372
    %p379 = scmp.eq.s32.totalorder %s20, 1
    %p380 = por %p378, %p379
    %p381 = scmp.ne.s32.totalorder %s373, %s376
    %p382 = scmp.eq.s32.totalorder %s20, 0
    %p383 = por %p381, %p382
    %p384 = scmp.ne.s32.totalorder %s373, %s376
    %p385 = scmp.eq.s32.totalorder %s25, 1
    %p386 = por %p384, %p385
    %p387 = scmp.ne.s32.totalorder %s376, %s377
    %p388 = scmp.eq.s32.totalorder %s25, 0
    %p389 = por %p387, %p388
    %p390 = scmp.ne.s32.totalorder %s376, %s377
    %p391 = scmp.eq.s32.totalorder %s26, 1
    %p392 = por %p390, %p391
    %p394 = scmp.ne.s32.totalorder %s377, %s393
    %p395 = scmp.eq.s32.totalorder %s26, 0
    %p396 = por %p394, %p395
    %p397 = scmp.le.s32.totalorder 1, %s20
    %p398 = scmp.lt.s32.totalorder %s20, 3
    %p399 = pnand %p397, %p398
    %p400 = pneg %p399
    // Predicated region
    $region9: #{nanogpt_classifier.6} parent=5 // pred_check
      _
    $region10: #{nanogpt_classifier.6} parent=5 // pred_check_branch
      %402 = sbr.rel (%p399) target = $region12
    $region11: #{nanogpt_classifier.6} parent=5 // pred_region
      %s403 = ssub.s32 %s20, 1
      // Predicated region
      $region13: #{nanogpt_classifier.6} parent=11 // pred_check
        %p404 = pneg %p172
      $region14: #{nanogpt_classifier.6} parent=11 // pred_check_branch
        %406 = sbr.rel (%p404) target = $region16
      $region15: #{nanogpt_classifier.6} parent=11 // pred_region
        _
      $region16: #{nanogpt_classifier.6} parent=11 // pred_fallthru
        _
      // Predicated region
      $region17: #{nanogpt_classifier.6} parent=11 // pred_check
        %p407 = pneg %p193
      $region18: #{nanogpt_classifier.6} parent=11 // pred_check_branch
        %409 = sbr.rel (%p407) target = $region20
      $region19: #{nanogpt_classifier.6} parent=11 // pred_region
        _
      $region20: #{nanogpt_classifier.6} parent=11 // pred_fallthru
        _
      // Predicated region
      $region21: #{nanogpt_classifier.6} parent=11 // pred_check
        %p410 = pneg %p214
      $region22: #{nanogpt_classifier.6} parent=11 // pred_check_branch
        %412 = sbr.rel (%p410) target = $region24
      $region23: #{nanogpt_classifier.6} parent=11 // pred_region
        _
      $region24: #{nanogpt_classifier.6} parent=11 // pred_fallthru
        _
      // Predicated region
      $region25: #{nanogpt_classifier.6} parent=11 // pred_check
        %p413 = pneg %p235
      $region26: #{nanogpt_classifier.6} parent=11 // pred_check_branch
        %415 = sbr.rel (%p413) target = $region28
      $region27: #{nanogpt_classifier.6} parent=11 // pred_region
        _
      $region28: #{nanogpt_classifier.6} parent=11 // pred_fallthru
        _
      // Predicated region
      $region29: #{nanogpt_classifier.6} parent=11 // pred_check
        %p416 = pneg %p256
      $region30: #{nanogpt_classifier.6} parent=11 // pred_check_branch
        %418 = sbr.rel (%p416) target = $region32
      $region31: #{nanogpt_classifier.6} parent=11 // pred_region
        _
      $region32: #{nanogpt_classifier.6} parent=11 // pred_fallthru
        _
      // Predicated region
      $region33: #{nanogpt_classifier.6} parent=11 // pred_check
        %p419 = pneg %p277
      $region34: #{nanogpt_classifier.6} parent=11 // pred_check_branch
        %421 = sbr.rel (%p419) target = $region36
      $region35: #{nanogpt_classifier.6} parent=11 // pred_region
        _
      $region36: #{nanogpt_classifier.6} parent=11 // pred_fallthru
        _
      // Predicated region
      $region37: #{nanogpt_classifier.6} parent=11 // pred_check
        %p422 = pneg %p298
      $region38: #{nanogpt_classifier.6} parent=11 // pred_check_branch
        %424 = sbr.rel (%p422) target = $region40
      $region39: #{nanogpt_classifier.6} parent=11 // pred_region
        _
      $region40: #{nanogpt_classifier.6} parent=11 // pred_fallthru
        _
      // Predicated region
      $region41: #{nanogpt_classifier.6} parent=11 // pred_check
        %p425 = pneg %p319
      $region42: #{nanogpt_classifier.6} parent=11 // pred_check_branch
        %427 = sbr.rel (%p425) target = $region44
      $region43: #{nanogpt_classifier.6} parent=11 // pred_region
        _
      $region44: #{nanogpt_classifier.6} parent=11 // pred_fallthru
        _
      // Predicated region
      $region45: #{nanogpt_classifier.6} parent=11 // pred_check
        %p428 = pneg %p340
      $region46: #{nanogpt_classifier.6} parent=11 // pred_check_branch
        %430 = sbr.rel (%p428) target = $region48
      $region47: #{nanogpt_classifier.6} parent=11 // pred_region
        _
      $region48: #{nanogpt_classifier.6} parent=11 // pred_fallthru
        _
      // Predicated region
      $region49: #{nanogpt_classifier.6} parent=11 // pred_check
        %p431 = pneg %p361
      $region50: #{nanogpt_classifier.6} parent=11 // pred_check_branch
        %433 = sbr.rel (%p431) target = $region52
      $region51: #{nanogpt_classifier.6} parent=11 // pred_region
        _
      $region52: #{nanogpt_classifier.6} parent=11 // pred_fallthru
        _
    $region12: #{nanogpt_classifier.6} parent=5 // pred_fallthru
      _
    %p434 = scmp.lt.s32.totalorder %s20, 2
    // Predicated region
    $region53: #{nanogpt_classifier.6} parent=5 // pred_check
      %p435 = pneg %p434
    $region54: #{nanogpt_classifier.6} parent=5 // pred_check_branch
      %437 = sbr.rel (%p435) target = $region56
    $region55: #{nanogpt_classifier.6} parent=5 // pred_region
      // Predicated region
      $region57: #{nanogpt_classifier.6} parent=55 // pred_check
        %p438 = pneg %p61
      $region58: #{nanogpt_classifier.6} parent=55 // pred_check_branch
        %440 = sbr.rel (%p438) target = $region60
      $region59: #{nanogpt_classifier.6} parent=55 // pred_region
        %p441 = scmp.lt.s32.totalorder %s27, 1
        %s442 = scalar_select %p441, %s27, 1
        %p443 = scmp.lt.s32.totalorder %s28, 0
        %s444 = scalar_select %p443, %s28, 0
        %s445 = sadd.s32 %s444, %s442
        %s446 = smul.addr %s445, 8
        %s447 = scalar_lea.vmem %s0, %s446
      $region60: #{nanogpt_classifier.6} parent=55 // pred_fallthru
        _
      // Predicated region
      $region61: #{nanogpt_classifier.6} parent=55 // pred_check
        %p448 = pneg %p89
      $region62: #{nanogpt_classifier.6} parent=55 // pred_check_branch
        %450 = sbr.rel (%p448) target = $region64
      $region63: #{nanogpt_classifier.6} parent=55 // pred_region
        %p451 = scmp.lt.s32.totalorder %s27, 1
        %s452 = scalar_select %p451, %s27, 1
        %p453 = scmp.lt.s32.totalorder %s28, 0
        %s454 = scalar_select %p453, %s28, 0
        %s455 = smul.addr %s452, 4
        %s456 = sadd.s32 %s454, %s455
        %s457 = smul.addr %s456, 4
        %s458 = scalar_lea.vmem %s1, %s457
      $region64: #{nanogpt_classifier.6} parent=55 // pred_fallthru
        _
      // Predicated region
      $region65: #{nanogpt_classifier.6} parent=55 // pred_check
        %p459 = pneg %p117
      $region66: #{nanogpt_classifier.6} parent=55 // pred_check_branch
        %461 = sbr.rel (%p459) target = $region68
      $region67: #{nanogpt_classifier.6} parent=55 // pred_region
        %p462 = scmp.lt.s32.totalorder %s27, 1
        %s463 = scalar_select %p462, %s27, 1
        %p464 = scmp.lt.s32.totalorder %s29, 0
        %s465 = scalar_select %p464, %s29, 0
        %s466 = smul.addr %s463, 4
        %s467 = sadd.s32 %s465, %s466
        %s468 = smul.addr %s467, 4
        %s469 = scalar_lea.vmem %s2, %s468
      $region68: #{nanogpt_classifier.6} parent=55 // pred_fallthru
        _
      // Predicated region
      $region69: #{nanogpt_classifier.6} parent=55 // pred_check
        %p470 = pneg %p145
      $region70: #{nanogpt_classifier.6} parent=55 // pred_check_branch
        %472 = sbr.rel (%p470) target = $region72
      $region71: #{nanogpt_classifier.6} parent=55 // pred_region
        %p473 = scmp.lt.s32.totalorder %s27, 1
        %s474 = scalar_select %p473, %s27, 1
        %p475 = scmp.lt.s32.totalorder %s29, 0
        %s476 = scalar_select %p475, %s29, 0
        %s477 = smul.addr %s474, 4
        %s478 = sadd.s32 %s476, %s477
        %s479 = smul.addr %s478, 4
        %s480 = scalar_lea.vmem %s3, %s479
      $region72: #{nanogpt_classifier.6} parent=55 // pred_fallthru
        _
    $region56: #{nanogpt_classifier.6} parent=5 // pred_fallthru
      _
    %p481 = scmp.le.s32.totalorder 1, %s20
    %p482 = scmp.lt.s32.totalorder %s20, 3
    %p483 = pnand %p481, %p482
    %p484 = pneg %p483
    // Predicated region
    $region73: #{nanogpt_classifier.6} parent=5 // pred_check
      _
    $region74: #{nanogpt_classifier.6} parent=5 // pred_check_branch
      %486 = sbr.rel (%p483) target = $region76
    $region75: #{nanogpt_classifier.6} parent=5 // pred_region
      %s487 = ssub.s32 %s20, 1
      %p488 = scmp.lt.s32.totalorder %s30, 1
      %s489 = scalar_select %p488, %s30, 1
      %p490 = scmp.lt.s32.totalorder %s31, 0
      %s491 = scalar_select %p490, %s31, 0
      %s492 = sadd.s32 %s491, %s489
      %s493 = smul.addr %s492, 8
      %s494 = scalar_lea.vmem %s0, %s493
      %p495 = pneg %p67
      %p496 = pneg %p64
      %p497 = scmp.lt.s32.totalorder %s30, 1
      %s498 = scalar_select %p497, %s30, 1
      %p499 = scmp.lt.s32.totalorder %s31, 0
      %s500 = scalar_select %p499, %s31, 0
      %s501 = smul.addr %s498, 4
      %s502 = sadd.s32 %s500, %s501
      %s503 = smul.addr %s502, 4
      %s504 = scalar_lea.vmem %s1, %s503
      %p505 = pneg %p95
      %p506 = pneg %p92
      %p507 = scmp.lt.s32.totalorder %s30, 1
      %s508 = scalar_select %p507, %s30, 1
      %p509 = scmp.lt.s32.totalorder %s32, 0
      %s510 = scalar_select %p509, %s32, 0
      %s511 = smul.addr %s508, 4
      %s512 = sadd.s32 %s510, %s511
      %s513 = smul.addr %s512, 4
      %s514 = scalar_lea.vmem %s2, %s513
      %p515 = pneg %p123
      %p516 = pneg %p120
      %p517 = scmp.lt.s32.totalorder %s30, 1
      %s518 = scalar_select %p517, %s30, 1
      %p519 = scmp.lt.s32.totalorder %s32, 0
      %s520 = scalar_select %p519, %s32, 0
      %s521 = smul.addr %s518, 4
      %s522 = sadd.s32 %s520, %s521
      %s523 = smul.addr %s522, 4
      %s524 = scalar_lea.vmem %s3, %s523
      %p525 = pneg %p151
      %p526 = pneg %p148
      %p527 = pneg %p172
      %p528 = pneg %p169
      %p529 = pneg %p193
      %p530 = pneg %p190
      %p531 = pneg %p214
      %p532 = pneg %p211
      %p533 = pneg %p235
      %p534 = pneg %p232
      %p535 = pneg %p256
      %p536 = pneg %p253
      %p537 = pneg %p277
      %p538 = pneg %p274
      %p539 = pneg %p298
      %p540 = pneg %p295
      %p541 = pneg %p319
      %p542 = pneg %p316
      %p543 = pneg %p340
      %p544 = pneg %p337
      %p545 = pneg %p361
      %p546 = pneg %p358
      %p547 = pneg %p389
      %p548 = pneg %p386
      %p549 = scmp.lt.s32.totalorder %s30, 1
      %s550 = scalar_select %p549, %s30, 1
      %p551 = scmp.lt.s32.totalorder %s31, 0
      %s552 = scalar_select %p551, %s31, 0
      %s553 = sadd.s32 %s552, %s550
      %s554 = smul.addr %s553, 8
      %s555 = scalar_lea.vmem %s14, %s554
      %p556 = scmp.lt.s32.totalorder %s30, 1
      %s557 = scalar_select %p556, %s30, 1
      %p558 = scmp.lt.s32.totalorder %s31, 0
      %s559 = scalar_select %p558, %s31, 0
      %s560 = sadd.s32 %s559, %s557
      %s561 = smul.addr %s560, 8
      %s562 = scalar_lea.vmem %s0, %s561
      %p563 = scmp.lt.s32.totalorder %s30, 1
      %s564 = scalar_select %p563, %s30, 1
      %p565 = scmp.lt.s32.totalorder %s31, 0
      %s566 = scalar_select %p565, %s31, 0
      %s567 = smul.addr %s564, 4
      %s568 = sadd.s32 %s566, %s567
      %s569 = smul.addr %s568, 4
      %s570 = scalar_lea.vmem %s1, %s569
      %p571 = scmp.lt.s32.totalorder %s30, 1
      %s572 = scalar_select %p571, %s30, 1
      %p573 = scmp.lt.s32.totalorder %s32, 0
      %s574 = scalar_select %p573, %s32, 0
      %s575 = smul.addr %s572, 4
      %s576 = sadd.s32 %s574, %s575
      %s577 = smul.addr %s576, 4
      %s578 = scalar_lea.vmem %s2, %s577
      %p579 = scmp.lt.s32.totalorder %s30, 1
      %s580 = scalar_select %p579, %s30, 1
      %p581 = scmp.lt.s32.totalorder %s32, 0
      %s582 = scalar_select %p581, %s32, 0
      %s583 = smul.addr %s580, 4
      %s584 = sadd.s32 %s582, %s583
      %s585 = smul.addr %s584, 4
      %s586 = scalar_lea.vmem %s3, %s585
      %p587 = scmp.lt.s32.totalorder %s30, 1
      %s588 = scalar_select %p587, %s30, 1
      %p589 = scmp.lt.s32.totalorder %s31, 0
      %s590 = scalar_select %p589, %s31, 0
      %s591 = sadd.s32 %s590, %s588
      %s592 = smul.addr %s591, 8
      %s593 = scalar_lea.vmem %s14, %s592
      %p595 = scmp.eq.s32.totalorder %s32, 0
      // Predicated region
      $region77: #{nanogpt_classifier.6} parent=75 // pred_check
        %p596 = pneg %p595
      $region78: #{nanogpt_classifier.6} parent=75 // pred_check_branch
        %598 = sbr.rel (%p596) target = $region80
      $region79: #{nanogpt_classifier.6} parent=75 // pred_region
        %vm599 = vcmask 7168
        %600 = vst.msk [vmem:[#allocation2] sm:$0xff] %vm599, -inf
        %601 = vst.msk [vmem:[#allocation2 + $0x8] sm:$0xff] %vm599, -inf
        %602 = vst.msk [vmem:[#allocation2 + $0x10] sm:$0xff] %vm599, -inf
        %603 = vst.msk [vmem:[#allocation2 + $0x18] sm:$0xff] %vm599, -inf
        %604 = vst.msk [vmem:[#allocation3] sm:$0xff] %vm599, 0.0
        %605 = vst.msk [vmem:[#allocation3 + $0x8] sm:$0xff] %vm599, 0.0
        %606 = vst.msk [vmem:[#allocation3 + $0x10] sm:$0xff] %vm599, 0.0
        %607 = vst.msk [vmem:[#allocation3 + $0x18] sm:$0xff] %vm599, 0.0
        %vm608 = vcmask 64512
        %609 = vst.msk [vmem:[#allocation4] sm:$0xff] %vm608, 0.0
        %610 = vst.msk [vmem:[#allocation4 + $0x8] sm:$0xff] %vm608, 0.0
        %611 = vst.msk [vmem:[#allocation4 + $0x10] sm:$0xff] %vm608, 0.0
        %612 = vst.msk [vmem:[#allocation4 + $0x18] sm:$0xff] %vm608, 0.0
      $region80: #{nanogpt_classifier.6} parent=75 // pred_fallthru
        _
      %v613 = vld [vmem:[%s570] sm:$0xf]
      %v614 = vld [vmem:[%s570 + $0x4] sm:$0xf]
      %v615 = vld [vmem:[%s570 + $0x8] sm:$0xf]
      %v616 = vld [vmem:[%s570 + $0xc] sm:$0xf]
      %v617 = vld [vmem:[%s578] sm:$0xf]
      %v618 = vld [vmem:[%s578 + $0x4] sm:$0xf]
      %v619 = vld [vmem:[%s578 + $0x8] sm:$0xf]
      %v620 = vld [vmem:[%s578 + $0xc] sm:$0xf]
      %v621 = vld [vmem:[%s586] sm:$0xf]
      %v622 = vld [vmem:[%s586 + $0x4] sm:$0xf]
      %v623 = vld [vmem:[%s586 + $0x8] sm:$0xf]
      %v624 = vld [vmem:[%s586 + $0xc] sm:$0xf]
      %vm625 = vcmask 64512
      %v627 = vsel %vm625, %v613, 0
      %v630 = vsel %vm625, %v617, 0
      %632 = vmatprep.subr.bf16.mxu0 0
      %633 = vmatpush1.bf16.xpose.msra.mxu0 0
      %634 = vmatprep.subr.bf16.mxu0 0
      %635 = vmatpush1.bf16.xpose.msra.mxu0 0
      %636 = vmatprep.subr.bf16.mxu0 0
      %637 = vmatpush1.bf16.xpose.msra.mxu0 0
      %638 = vmatprep.subr.bf16.mxu0 0
      %639 = vmatpush1.bf16.xpose.msra.mxu0 0
      %640 = vmatprep.subr.bf16.mxu0 0
      %641 = vmatpush1.bf16.xpose.msra.mxu0 0
      %642 = vmatprep.subr.bf16.mxu0 0
      %643 = vmatpush1.bf16.xpose.msra.mxu0 0
      %644 = vmatprep.subr.bf16.mxu0 0
      %645 = vmatpush1.bf16.xpose.msra.mxu0 0
      %646 = vmatprep.subr.bf16.mxu0 0
      %647 = vmatpush1.bf16.xpose.msra.mxu0 %v630
      %648 = vmatprep.subr.bf16.mxu0 0
      %649 = vmatpush2.bf16.xpose.msra.mxu0 0
      %650 = vmatprep.subr.bf16.mxu0 0
      %651 = vmatpush2.bf16.xpose.msra.mxu0 0
      %652 = vmatprep.subr.bf16.mxu0 0
      %653 = vmatpush2.bf16.xpose.msra.mxu0 0
      %654 = vmatprep.subr.bf16.mxu0 0
      %655 = vmatpush2.bf16.xpose.msra.mxu0 0
      %656 = vmatprep.subr.bf16.mxu0 0
      %657 = vmatpush2.bf16.xpose.msra.mxu0 0
      %658 = vmatprep.subr.bf16.mxu0 0
      %659 = vmatpush2.bf16.xpose.msra.mxu0 0
      %660 = vmatprep.subr.bf16.mxu0 0
      %661 = vmatpush2.bf16.xpose.msra.mxu0 0
      %662 = vmatprep.subr.bf16.mxu0 0
      %663 = vmatpush2.bf16.xpose.msra.mxu0 0
      %664 = vmatprep.mubr.bf16.mxu0 0
      %665 = vmatmul.mubr.bf16.gmra.mxu0 %v627
      %v666 = vpop.f32.mrf.mxu0
      %v667 = vadd.f32 0.0, %v666
      %v668 = vpop.f32.mrf.mxu0
      %v669 = vpop.f32.mrf.mxu0
      %v670 = vpop.f32.mrf.mxu0
      %671 = vdwg.mxu0
      %v673 = vsel %vm625, %v614, 0
      %v676 = vsel %vm625, %v618, 0
      %678 = vmatprep.subr.bf16.mxu0 0
      %679 = vmatpush1.bf16.xpose.msra.mxu0 0
      %680 = vmatprep.subr.bf16.mxu0 0
      %681 = vmatpush1.bf16.xpose.msra.mxu0 0
      %682 = vmatprep.subr.bf16.mxu0 0
      %683 = vmatpush1.bf16.xpose.msra.mxu0 0
      %684 = vmatprep.subr.bf16.mxu0 0
      %685 = vmatpush1.bf16.xpose.msra.mxu0 0
      %686 = vmatprep.subr.bf16.mxu0 0
      %687 = vmatpush1.bf16.xpose.msra.mxu0 0
      %688 = vmatprep.subr.bf16.mxu0 0
      %689 = vmatpush1.bf16.xpose.msra.mxu0 0
      %690 = vmatprep.subr.bf16.mxu0 0
      %691 = vmatpush1.bf16.xpose.msra.mxu0 0
      %692 = vmatprep.subr.bf16.mxu0 0
      %693 = vmatpush1.bf16.xpose.msra.mxu0 %v676
      %694 = vmatprep.subr.bf16.mxu0 0
      %695 = vmatpush2.bf16.xpose.msra.mxu0 0
      %696 = vmatprep.subr.bf16.mxu0 0
      %697 = vmatpush2.bf16.xpose.msra.mxu0 0
      %698 = vmatprep.subr.bf16.mxu0 0
      %699 = vmatpush2.bf16.xpose.msra.mxu0 0
      %700 = vmatprep.subr.bf16.mxu0 0
      %701 = vmatpush2.bf16.xpose.msra.mxu0 0
      %702 = vmatprep.subr.bf16.mxu0 0
      %703 = vmatpush2.bf16.xpose.msra.mxu0 0
      %704 = vmatprep.subr.bf16.mxu0 0
      %705 = vmatpush2.bf16.xpose.msra.mxu0 0
      %706 = vmatprep.subr.bf16.mxu0 0
      %707 = vmatpush2.bf16.xpose.msra.mxu0 0
      %708 = vmatprep.subr.bf16.mxu0 0
      %709 = vmatpush2.bf16.xpose.msra.mxu0 0
      %710 = vmatprep.mubr.bf16.mxu0 0
      %711 = vmatmul.mubr.bf16.gmra.mxu0 %v673
      %v712 = vpop.f32.mrf.mxu0
      %v713 = vadd.f32 0.0, %v712
      %v714 = vpop.f32.mrf.mxu0
      %v715 = vpop.f32.mrf.mxu0
      %v716 = vpop.f32.mrf.mxu0
      %717 = vdwg.mxu0
      %v719 = vsel %vm625, %v615, 0
      %v722 = vsel %vm625, %v619, 0
      %724 = vmatprep.subr.bf16.mxu0 0
      %725 = vmatpush1.bf16.xpose.msra.mxu0 0
      %726 = vmatprep.subr.bf16.mxu0 0
      %727 = vmatpush1.bf16.xpose.msra.mxu0 0
      %728 = vmatprep.subr.bf16.mxu0 0
      %729 = vmatpush1.bf16.xpose.msra.mxu0 0
      %730 = vmatprep.subr.bf16.mxu0 0
      %731 = vmatpush1.bf16.xpose.msra.mxu0 0
      %732 = vmatprep.subr.bf16.mxu0 0
      %733 = vmatpush1.bf16.xpose.msra.mxu0 0
      %734 = vmatprep.subr.bf16.mxu0 0
      %735 = vmatpush1.bf16.xpose.msra.mxu0 0
      %736 = vmatprep.subr.bf16.mxu0 0
      %737 = vmatpush1.bf16.xpose.msra.mxu0 0
      %738 = vmatprep.subr.bf16.mxu0 0
      %739 = vmatpush1.bf16.xpose.msra.mxu0 %v722
      %740 = vmatprep.subr.bf16.mxu0 0
      %741 = vmatpush2.bf16.xpose.msra.mxu0 0
      %742 = vmatprep.subr.bf16.mxu0 0
      %743 = vmatpush2.bf16.xpose.msra.mxu0 0
      %744 = vmatprep.subr.bf16.mxu0 0
      %745 = vmatpush2.bf16.xpose.msra.mxu0 0
      %746 = vmatprep.subr.bf16.mxu0 0
      %747 = vmatpush2.bf16.xpose.msra.mxu0 0
      %748 = vmatprep.subr.bf16.mxu0 0
      %749 = vmatpush2.bf16.xpose.msra.mxu0 0
      %750 = vmatprep.subr.bf16.mxu0 0
      %751 = vmatpush2.bf16.xpose.msra.mxu0 0
      %752 = vmatprep.subr.bf16.mxu0 0
      %753 = vmatpush2.bf16.xpose.msra.mxu0 0
      %754 = vmatprep.subr.bf16.mxu0 0
      %755 = vmatpush2.bf16.xpose.msra.mxu0 0
      %756 = vmatprep.mubr.bf16.mxu0 0
      %757 = vmatmul.mubr.bf16.gmra.mxu0 %v719
      %v758 = vpop.f32.mrf.mxu0
      %v759 = vadd.f32 0.0, %v758
      %v760 = vpop.f32.mrf.mxu0
      %v761 = vpop.f32.mrf.mxu0
      %v762 = vpop.f32.mrf.mxu0
      %763 = vdwg.mxu0
      %v765 = vsel %vm625, %v616, 0
      %v768 = vsel %vm625, %v620, 0
      %770 = vmatprep.subr.bf16.mxu0 0
      %771 = vmatpush1.bf16.xpose.msra.mxu0 0
      %772 = vmatprep.subr.bf16.mxu0 0
      %773 = vmatpush1.bf16.xpose.msra.mxu0 0
      %774 = vmatprep.subr.bf16.mxu0 0
      %775 = vmatpush1.bf16.xpose.msra.mxu0 0
      %776 = vmatprep.subr.bf16.mxu0 0
      %777 = vmatpush1.bf16.xpose.msra.mxu0 0
      %778 = vmatprep.subr.bf16.mxu0 0
      %779 = vmatpush1.bf16.xpose.msra.mxu0 0
      %780 = vmatprep.subr.bf16.mxu0 0
      %781 = vmatpush1.bf16.xpose.msra.mxu0 0
      %782 = vmatprep.subr.bf16.mxu0 0
      %783 = vmatpush1.bf16.xpose.msra.mxu0 0
      %784 = vmatprep.subr.bf16.mxu0 0
      %785 = vmatpush1.bf16.xpose.msra.mxu0 %v768
      %786 = vmatprep.subr.bf16.mxu0 0
      %787 = vmatpush2.bf16.xpose.msra.mxu0 0
      %788 = vmatprep.subr.bf16.mxu0 0
      %789 = vmatpush2.bf16.xpose.msra.mxu0 0
      %790 = vmatprep.subr.bf16.mxu0 0
      %791 = vmatpush2.bf16.xpose.msra.mxu0 0
      %792 = vmatprep.subr.bf16.mxu0 0
      %793 = vmatpush2.bf16.xpose.msra.mxu0 0
      %794 = vmatprep.subr.bf16.mxu0 0
      %795 = vmatpush2.bf16.xpose.msra.mxu0 0
      %796 = vmatprep.subr.bf16.mxu0 0
      %797 = vmatpush2.bf16.xpose.msra.mxu0 0
      %798 = vmatprep.subr.bf16.mxu0 0
      %799 = vmatpush2.bf16.xpose.msra.mxu0 0
      %800 = vmatprep.subr.bf16.mxu0 0
      %801 = vmatpush2.bf16.xpose.msra.mxu0 0
      %802 = vmatprep.mubr.bf16.mxu0 0
      %803 = vmatmul.mubr.bf16.gmra.mxu0 %v765
      %v804 = vpop.f32.mrf.mxu0
      %v805 = vadd.f32 0.0, %v804
      %v806 = vpop.f32.mrf.mxu0
      %v807 = vpop.f32.mrf.mxu0
      %v808 = vpop.f32.mrf.mxu0
      %809 = vdwg.mxu0
      %v810 = vmul.f32 %v667, 0.35355338
      %v811 = vmul.f32 %v713, 0.35355338
      %v812 = vmul.f32 %v759, 0.35355338
      %v813 = vmul.f32 %v805, 0.35355338
      %v814 = vld [vmem:[#allocation2] sm:$0xff]
      %v815 = vld [vmem:[#allocation2 + $0x8] sm:$0xff]
      %v816 = vld [vmem:[#allocation2 + $0x10] sm:$0xff]
      %v817 = vld [vmem:[#allocation2 + $0x18] sm:$0xff]
      %v818 = vsel %vm625, %v810, -inf
      %819 = vmax.xlane.f32.xlu0 %v818
      %v820 = vpop.xlane.xlu0 %819
      %v821 = vsel %vm625, %v811, -inf
      %822 = vmax.xlane.f32.xlu0 %v821
      %v823 = vpop.xlane.xlu0 %822
      %v824 = vsel %vm625, %v812, -inf
      %825 = vmax.xlane.f32.xlu0 %v824
      %v826 = vpop.xlane.xlu0 %825
      %v827 = vsel %vm625, %v813, -inf
      %828 = vmax.xlane.f32.xlu0 %v827
      %v829 = vpop.xlane.xlu0 %828
      %v830 = vmax.f32 %v814, %v820
      %v831 = vmax.f32 %v815, %v823
      %v832 = vmax.f32 %v816, %v826
      %v833 = vmax.f32 %v817, %v829
      %v834 = vsub.f32 %v814, %v830
      %v835 = vsub.f32 %v815, %v831
      %v836 = vsub.f32 %v816, %v832
      %v837 = vsub.f32 %v817, %v833
      %v838 = vmul.f32 %v834, 1.442695
      %v839 = vpow.pop %v838
      %v840 = vmul.f32 %v835, 1.442695
      %v841 = vpow.pop %v840
      %v842 = vmul.f32 %v836, 1.442695
      %v843 = vpow.pop %v842
      %v844 = vmul.f32 %v837, 1.442695
      %v845 = vpow.pop %v844
      %847 = vset.pattern.permute.xlu0 0
      %848 = vperm.xlu0 %847, %v830
      %v849 = vpop.permute.xlu0 %848
      %852 = vset.pattern.permute.xlu0 0
      %853 = vperm.xlu0 %852, %v831
      %v854 = vpop.permute.xlu0 %853
      %857 = vset.pattern.permute.xlu0 0
      %858 = vperm.xlu0 %857, %v832
      %v859 = vpop.permute.xlu0 %858
      %862 = vset.pattern.permute.xlu0 0
      %863 = vperm.xlu0 %862, %v833
      %v864 = vpop.permute.xlu0 %863
      %v866 = vsub.f32 %v810, %v849
      %v867 = vsub.f32 %v811, %v854
      %v868 = vsub.f32 %v812, %v859
      %v869 = vsub.f32 %v813, %v864
      %v870 = vmul.f32 %v866, 1.442695
      %v871 = vpow.pop %v870
      %v872 = vmul.f32 %v867, 1.442695
      %v873 = vpow.pop %v872
      %v874 = vmul.f32 %v868, 1.442695
      %v875 = vpow.pop %v874
      %v876 = vmul.f32 %v869, 1.442695
      %v877 = vpow.pop %v876
      %v878 = vld [vmem:[#allocation3] sm:$0xff]
      %v879 = vld [vmem:[#allocation3 + $0x8] sm:$0xff]
      %v880 = vld [vmem:[#allocation3 + $0x10] sm:$0xff]
      %v881 = vld [vmem:[#allocation3 + $0x18] sm:$0xff]
      %v882 = vmul.f32 %v839, %v878
      %v883 = vmul.f32 %v841, %v879
      %v884 = vmul.f32 %v843, %v880
      %v885 = vmul.f32 %v845, %v881
      %v886 = vsel %vm625, %v871, 0.0
      %887 = vadd.xlane.f32.xlu0 %v886
      %v888 = vpop.xlane.xlu0 %887
      %v889 = vsel %vm625, %v873, 0.0
      %890 = vadd.xlane.f32.xlu0 %v889
      %v891 = vpop.xlane.xlu0 %890
      %v892 = vsel %vm625, %v875, 0.0
      %893 = vadd.xlane.f32.xlu0 %v892
      %v894 = vpop.xlane.xlu0 %893
      %v895 = vsel %vm625, %v877, 0.0
      %896 = vadd.xlane.f32.xlu0 %v895
      %v897 = vpop.xlane.xlu0 %896
      %v898 = vadd.f32 %v882, %v888
      %v899 = vadd.f32 %v883, %v891
      %v900 = vadd.f32 %v884, %v894
      %v901 = vadd.f32 %v885, %v897
      %vm902 = vcmask 7168
      %903 = vst.msk [vmem:[#allocation3] sm:$0xff] %vm902, %v898
      %904 = vst.msk [vmem:[#allocation3 + $0x8] sm:$0xff] %vm902, %v899
      %905 = vst.msk [vmem:[#allocation3 + $0x10] sm:$0xff] %vm902, %v900
      %906 = vst.msk [vmem:[#allocation3 + $0x18] sm:$0xff] %vm902, %v901
      %v907 = vld [vmem:[#allocation4] sm:$0xff]
      %v908 = vld [vmem:[#allocation4 + $0x8] sm:$0xff]
      %v909 = vld [vmem:[#allocation4 + $0x10] sm:$0xff]
      %v910 = vld [vmem:[#allocation4 + $0x18] sm:$0xff]
      %912 = vset.pattern.permute.xlu0 0
      %913 = vperm.xlu0 %912, %v839
      %v914 = vpop.permute.xlu0 %913
      %917 = vset.pattern.permute.xlu0 0
      %918 = vperm.xlu0 %917, %v841
      %v919 = vpop.permute.xlu0 %918
      %922 = vset.pattern.permute.xlu0 0
      %923 = vperm.xlu0 %922, %v843
      %v924 = vpop.permute.xlu0 %923
      %927 = vset.pattern.permute.xlu0 0
      %928 = vperm.xlu0 %927, %v845
      %v929 = vpop.permute.xlu0 %928
      %v931 = vmul.f32 %v914, %v907
      %v932 = vmul.f32 %v919, %v908
      %v933 = vmul.f32 %v924, %v909
      %v934 = vmul.f32 %v929, %v910
      %v935 = vpack.c.bf16 %v871, %v871
      %v936 = vpack.c.bf16 %v873, %v873
      %v937 = vpack.c.bf16 %v875, %v875
      %v938 = vpack.c.bf16 %v877, %v877
      %v940 = vsel %vm625, %v935, 0
      %vm942 = vcmask 1043456
      %v944 = vsel %vm942, %v621, 0
      %946 = vmatprep.subr.bf16.mxu0 0
      %947 = vmatpush1.bf16.msra.mxu0 0
      %948 = vmatprep.subr.bf16.mxu0 0
      %949 = vmatpush1.bf16.msra.mxu0 0
      %950 = vmatprep.subr.bf16.mxu0 0
      %951 = vmatpush1.bf16.msra.mxu0 0
      %952 = vmatprep.subr.bf16.mxu0 0
      %953 = vmatpush1.bf16.msra.mxu0 0
      %954 = vmatprep.subr.bf16.mxu0 0
      %955 = vmatpush1.bf16.msra.mxu0 0
      %956 = vmatprep.subr.bf16.mxu0 0
      %957 = vmatpush1.bf16.msra.mxu0 0
      %958 = vmatprep.subr.bf16.mxu0 0
      %959 = vmatpush1.bf16.msra.mxu0 0
      %960 = vmatprep.subr.bf16.mxu0 0
      %961 = vmatpush1.bf16.msra.mxu0 %v944
      %962 = vmatprep.subr.bf16.mxu0 0
      %963 = vmatpush2.bf16.msra.mxu0 0
      %964 = vmatprep.subr.bf16.mxu0 0
      %965 = vmatpush2.bf16.msra.mxu0 0
      %966 = vmatprep.subr.bf16.mxu0 0
      %967 = vmatpush2.bf16.msra.mxu0 0
      %968 = vmatprep.subr.bf16.mxu0 0
      %969 = vmatpush2.bf16.msra.mxu0 0
      %970 = vmatprep.subr.bf16.mxu0 0
      %971 = vmatpush2.bf16.msra.mxu0 0
      %972 = vmatprep.subr.bf16.mxu0 0
      %973 = vmatpush2.bf16.msra.mxu0 0
      %974 = vmatprep.subr.bf16.mxu0 0
      %975 = vmatpush2.bf16.msra.mxu0 0
      %976 = vmatprep.subr.bf16.mxu0 0
      %977 = vmatpush2.bf16.msra.mxu0 0
      %978 = vmatprep.mubr.bf16.mxu0 0
      %979 = vmatmul.mubr.bf16.gmra.mxu0 %v940
      %v980 = vpop.f32.mrf.mxu0
      %v981 = vadd.f32 0.0, %v980
      %v982 = vpop.f32.mrf.mxu0
      %v983 = vpop.f32.mrf.mxu0
      %v984 = vpop.f32.mrf.mxu0
      %985 = vdwg.mxu0
      %v987 = vsel %vm625, %v936, 0
      %v990 = vsel %vm942, %v622, 0
      %992 = vmatprep.subr.bf16.mxu0 0
      %993 = vmatpush1.bf16.msra.mxu0 0
      %994 = vmatprep.subr.bf16.mxu0 0
      %995 = vmatpush1.bf16.msra.mxu0 0
      %996 = vmatprep.subr.bf16.mxu0 0
      %997 = vmatpush1.bf16.msra.mxu0 0
      %998 = vmatprep.subr.bf16.mxu0 0
      %999 = vmatpush1.bf16.msra.mxu0 0
      %1000 = vmatprep.subr.bf16.mxu0 0
      %1001 = vmatpush1.bf16.msra.mxu0 0
      %1002 = vmatprep.subr.bf16.mxu0 0
      %1003 = vmatpush1.bf16.msra.mxu0 0
      %1004 = vmatprep.subr.bf16.mxu0 0
      %1005 = vmatpush1.bf16.msra.mxu0 0
      %1006 = vmatprep.subr.bf16.mxu0 0
      %1007 = vmatpush1.bf16.msra.mxu0 %v990
      %1008 = vmatprep.subr.bf16.mxu0 0
      %1009 = vmatpush2.bf16.msra.mxu0 0
      %1010 = vmatprep.subr.bf16.mxu0 0
      %1011 = vmatpush2.bf16.msra.mxu0 0
      %1012 = vmatprep.subr.bf16.mxu0 0
      %1013 = vmatpush2.bf16.msra.mxu0 0
      %1014 = vmatprep.subr.bf16.mxu0 0
      %1015 = vmatpush2.bf16.msra.mxu0 0
      %1016 = vmatprep.subr.bf16.mxu0 0
      %1017 = vmatpush2.bf16.msra.mxu0 0
      %1018 = vmatprep.subr.bf16.mxu0 0
      %1019 = vmatpush2.bf16.msra.mxu0 0
      %1020 = vmatprep.subr.bf16.mxu0 0
      %1021 = vmatpush2.bf16.msra.mxu0 0
      %1022 = vmatprep.subr.bf16.mxu0 0
      %1023 = vmatpush2.bf16.msra.mxu0 0
      %1024 = vmatprep.mubr.bf16.mxu0 0
      %1025 = vmatmul.mubr.bf16.gmra.mxu0 %v987
      %v1026 = vpop.f32.mrf.mxu0
      %v1027 = vadd.f32 0.0, %v1026
      %v1028 = vpop.f32.mrf.mxu0
      %v1029 = vpop.f32.mrf.mxu0
      %v1030 = vpop.f32.mrf.mxu0
      %1031 = vdwg.mxu0
      %v1033 = vsel %vm625, %v937, 0
      %v1036 = vsel %vm942, %v623, 0
      %1038 = vmatprep.subr.bf16.mxu0 0
      %1039 = vmatpush1.bf16.msra.mxu0 0
      %1040 = vmatprep.subr.bf16.mxu0 0
      %1041 = vmatpush1.bf16.msra.mxu0 0
      %1042 = vmatprep.subr.bf16.mxu0 0
      %1043 = vmatpush1.bf16.msra.mxu0 0
      %1044 = vmatprep.subr.bf16.mxu0 0
      %1045 = vmatpush1.bf16.msra.mxu0 0
      %1046 = vmatprep.subr.bf16.mxu0 0
      %1047 = vmatpush1.bf16.msra.mxu0 0
      %1048 = vmatprep.subr.bf16.mxu0 0
      %1049 = vmatpush1.bf16.msra.mxu0 0
      %1050 = vmatprep.subr.bf16.mxu0 0
      %1051 = vmatpush1.bf16.msra.mxu0 0
      %1052 = vmatprep.subr.bf16.mxu0 0
      %1053 = vmatpush1.bf16.msra.mxu0 %v1036
      %1054 = vmatprep.subr.bf16.mxu0 0
      %1055 = vmatpush2.bf16.msra.mxu0 0
      %1056 = vmatprep.subr.bf16.mxu0 0
      %1057 = vmatpush2.bf16.msra.mxu0 0
      %1058 = vmatprep.subr.bf16.mxu0 0
      %1059 = vmatpush2.bf16.msra.mxu0 0
      %1060 = vmatprep.subr.bf16.mxu0 0
      %1061 = vmatpush2.bf16.msra.mxu0 0
      %1062 = vmatprep.subr.bf16.mxu0 0
      %1063 = vmatpush2.bf16.msra.mxu0 0
      %1064 = vmatprep.subr.bf16.mxu0 0
      %1065 = vmatpush2.bf16.msra.mxu0 0
      %1066 = vmatprep.subr.bf16.mxu0 0
      %1067 = vmatpush2.bf16.msra.mxu0 0
      %1068 = vmatprep.subr.bf16.mxu0 0
      %1069 = vmatpush2.bf16.msra.mxu0 0
      %1070 = vmatprep.mubr.bf16.mxu0 0
      %1071 = vmatmul.mubr.bf16.gmra.mxu0 %v1033
      %v1072 = vpop.f32.mrf.mxu0
      %v1073 = vadd.f32 0.0, %v1072
      %v1074 = vpop.f32.mrf.mxu0
      %v1075 = vpop.f32.mrf.mxu0
      %v1076 = vpop.f32.mrf.mxu0
      %1077 = vdwg.mxu0
      %v1079 = vsel %vm625, %v938, 0
      %v1082 = vsel %vm942, %v624, 0
      %1084 = vmatprep.subr.bf16.mxu0 0
      %1085 = vmatpush1.bf16.msra.mxu0 0
      %1086 = vmatprep.subr.bf16.mxu0 0
      %1087 = vmatpush1.bf16.msra.mxu0 0
      %1088 = vmatprep.subr.bf16.mxu0 0
      %1089 = vmatpush1.bf16.msra.mxu0 0
      %1090 = vmatprep.subr.bf16.mxu0 0
      %1091 = vmatpush1.bf16.msra.mxu0 0
      %1092 = vmatprep.subr.bf16.mxu0 0
      %1093 = vmatpush1.bf16.msra.mxu0 0
      %1094 = vmatprep.subr.bf16.mxu0 0
      %1095 = vmatpush1.bf16.msra.mxu0 0
      %1096 = vmatprep.subr.bf16.mxu0 0
      %1097 = vmatpush1.bf16.msra.mxu0 0
      %1098 = vmatprep.subr.bf16.mxu0 0
      %1099 = vmatpush1.bf16.msra.mxu0 %v1082
      %1100 = vmatprep.subr.bf16.mxu0 0
      %1101 = vmatpush2.bf16.msra.mxu0 0
      %1102 = vmatprep.subr.bf16.mxu0 0
      %1103 = vmatpush2.bf16.msra.mxu0 0
      %1104 = vmatprep.subr.bf16.mxu0 0
      %1105 = vmatpush2.bf16.msra.mxu0 0
      %1106 = vmatprep.subr.bf16.mxu0 0
      %1107 = vmatpush2.bf16.msra.mxu0 0
      %1108 = vmatprep.subr.bf16.mxu0 0
      %1109 = vmatpush2.bf16.msra.mxu0 0
      %1110 = vmatprep.subr.bf16.mxu0 0
      %1111 = vmatpush2.bf16.msra.mxu0 0
      %1112 = vmatprep.subr.bf16.mxu0 0
      %1113 = vmatpush2.bf16.msra.mxu0 0
      %1114 = vmatprep.subr.bf16.mxu0 0
      %1115 = vmatpush2.bf16.msra.mxu0 0
      %1116 = vmatprep.mubr.bf16.mxu0 0
      %1117 = vmatmul.mubr.bf16.gmra.mxu0 %v1079
      %v1118 = vpop.f32.mrf.mxu0
      %v1119 = vadd.f32 0.0, %v1118
      %v1120 = vpop.f32.mrf.mxu0
      %v1121 = vpop.f32.mrf.mxu0
      %v1122 = vpop.f32.mrf.mxu0
      %1123 = vdwg.mxu0
      %v1124 = vadd.f32 %v931, %v981
      %v1125 = vadd.f32 %v932, %v1027
      %v1126 = vadd.f32 %v933, %v1073
      %v1127 = vadd.f32 %v934, %v1119
      %1128 = vst.msk [vmem:[#allocation4] sm:$0xff] %vm625, %v1124
      %1129 = vst.msk [vmem:[#allocation4 + $0x8] sm:$0xff] %vm625, %v1125
      %1130 = vst.msk [vmem:[#allocation4 + $0x10] sm:$0xff] %vm625, %v1126
      %1131 = vst.msk [vmem:[#allocation4 + $0x18] sm:$0xff] %vm625, %v1127
      %1132 = vst.msk [vmem:[#allocation2] sm:$0xff] %vm902, %v830
      %1133 = vst.msk [vmem:[#allocation2 + $0x8] sm:$0xff] %vm902, %v831
      %1134 = vst.msk [vmem:[#allocation2 + $0x10] sm:$0xff] %vm902, %v832
      %1135 = vst.msk [vmem:[#allocation2 + $0x18] sm:$0xff] %vm902, %v833
      // Predicated region
      $region81: #{nanogpt_classifier.6} parent=75 // pred_check
        %p1136 = pneg %p595
      $region82: #{nanogpt_classifier.6} parent=75 // pred_check_branch
        %1138 = sbr.rel (%p1136) target = $region84
      $region83: #{nanogpt_classifier.6} parent=75 // pred_region
        %v1139 = vld [vmem:[#allocation4] sm:$0xff]
        %v1140 = vld [vmem:[#allocation4 + $0x8] sm:$0xff]
        %v1141 = vld [vmem:[#allocation4 + $0x10] sm:$0xff]
        %v1142 = vld [vmem:[#allocation4 + $0x18] sm:$0xff]
        %v1143 = vld [vmem:[#allocation3] sm:$0xff]
        %v1144 = vld [vmem:[#allocation3 + $0x8] sm:$0xff]
        %v1145 = vld [vmem:[#allocation3 + $0x10] sm:$0xff]
        %v1146 = vld [vmem:[#allocation3 + $0x18] sm:$0xff]
        %v1147 = vrcp.pop %v1143
        %v1148 = vrcp.pop %v1144
        %v1149 = vrcp.pop %v1145
        %v1150 = vrcp.pop %v1146
        %1152 = vset.pattern.permute.xlu0 0
        %1153 = vperm.xlu0 %1152, %v1147
        %v1154 = vpop.permute.xlu0 %1153
        %1157 = vset.pattern.permute.xlu0 0
        %1158 = vperm.xlu0 %1157, %v1148
        %v1159 = vpop.permute.xlu0 %1158
        %1162 = vset.pattern.permute.xlu0 0
        %1163 = vperm.xlu0 %1162, %v1149
        %v1164 = vpop.permute.xlu0 %1163
        %1167 = vset.pattern.permute.xlu0 0
        %1168 = vperm.xlu0 %1167, %v1150
        %v1169 = vpop.permute.xlu0 %1168
        %v1171 = vmul.f32 %v1139, %v1154
        %v1172 = vmul.f32 %v1140, %v1159
        %v1173 = vmul.f32 %v1141, %v1164
        %v1174 = vmul.f32 %v1142, %v1169
        %v1175 = vpack.c.bf16 %v1171, %v1171
        %v1176 = vpack.c.bf16 %v1172, %v1172
        %v1177 = vpack.c.bf16 %v1173, %v1173
        %v1178 = vpack.c.bf16 %v1174, %v1174
        %v1179 = vld [vmem:[%s4] sm:$0xf]
        %v1180 = vld [vmem:[%s4 + $0x4] sm:$0xf]
        %v1181 = vld [vmem:[%s4 + $0x8] sm:$0xf]
        %v1182 = vld [vmem:[%s4 + $0xc] sm:$0xf]
        %v1184 = vsel %vm625, %v1175, 0
        %v1187 = vsel %vm942, %v1179, 0
        %1189 = vmatprep.subr.bf16.mxu0 0
        %1190 = vmatpush1.bf16.msra.mxu0 0
        %1191 = vmatprep.subr.bf16.mxu0 0
        %1192 = vmatpush1.bf16.msra.mxu0 0
        %1193 = vmatprep.subr.bf16.mxu0 0
        %1194 = vmatpush1.bf16.msra.mxu0 0
        %1195 = vmatprep.subr.bf16.mxu0 0
        %1196 = vmatpush1.bf16.msra.mxu0 0
        %1197 = vmatprep.subr.bf16.mxu0 0
        %1198 = vmatpush1.bf16.msra.mxu0 0
        %1199 = vmatprep.subr.bf16.mxu0 0
        %1200 = vmatpush1.bf16.msra.mxu0 0
        %1201 = vmatprep.subr.bf16.mxu0 0
        %1202 = vmatpush1.bf16.msra.mxu0 0
        %1203 = vmatprep.subr.bf16.mxu0 0
        %1204 = vmatpush1.bf16.msra.mxu0 %v1187
        %1205 = vmatprep.subr.bf16.mxu0 0
        %1206 = vmatpush2.bf16.msra.mxu0 0
        %1207 = vmatprep.subr.bf16.mxu0 0
        %1208 = vmatpush2.bf16.msra.mxu0 0
        %1209 = vmatprep.subr.bf16.mxu0 0
        %1210 = vmatpush2.bf16.msra.mxu0 0
        %1211 = vmatprep.subr.bf16.mxu0 0
        %1212 = vmatpush2.bf16.msra.mxu0 0
        %1213 = vmatprep.subr.bf16.mxu0 0
        %1214 = vmatpush2.bf16.msra.mxu0 0
        %1215 = vmatprep.subr.bf16.mxu0 0
        %1216 = vmatpush2.bf16.msra.mxu0 0
        %1217 = vmatprep.subr.bf16.mxu0 0
        %1218 = vmatpush2.bf16.msra.mxu0 0
        %1219 = vmatprep.subr.bf16.mxu0 0
        %1220 = vmatpush2.bf16.msra.mxu0 0
        %1221 = vmatprep.mubr.bf16.mxu0 0
        %1222 = vmatmul.mubr.bf16.gmra.mxu0 %v1184
        %v1223 = vpop.f32.mrf.mxu0
        %v1224 = vadd.f32 0.0, %v1223
        %v1225 = vpop.f32.mrf.mxu0
        %v1226 = vpop.f32.mrf.mxu0
        %v1227 = vpop.f32.mrf.mxu0
        %1228 = vdwg.mxu0
        %v1230 = vsel %vm625, %v1176, 0
        %v1233 = vsel %vm942, %v1180, 0
        %1235 = vmatprep.subr.bf16.mxu0 0
        %1236 = vmatpush1.bf16.msra.mxu0 0
        %1237 = vmatprep.subr.bf16.mxu0 0
        %1238 = vmatpush1.bf16.msra.mxu0 0
        %1239 = vmatprep.subr.bf16.mxu0 0
        %1240 = vmatpush1.bf16.msra.mxu0 0
        %1241 = vmatprep.subr.bf16.mxu0 0
        %1242 = vmatpush1.bf16.msra.mxu0 0
        %1243 = vmatprep.subr.bf16.mxu0 0
        %1244 = vmatpush1.bf16.msra.mxu0 0
        %1245 = vmatprep.subr.bf16.mxu0 0
        %1246 = vmatpush1.bf16.msra.mxu0 0
        %1247 = vmatprep.subr.bf16.mxu0 0
        %1248 = vmatpush1.bf16.msra.mxu0 0
        %1249 = vmatprep.subr.bf16.mxu0 0
        %1250 = vmatpush1.bf16.msra.mxu0 %v1233
        %1251 = vmatprep.subr.bf16.mxu0 0
        %1252 = vmatpush2.bf16.msra.mxu0 0
        %1253 = vmatprep.subr.bf16.mxu0 0
        %1254 = vmatpush2.bf16.msra.mxu0 0
        %1255 = vmatprep.subr.bf16.mxu0 0
        %1256 = vmatpush2.bf16.msra.mxu0 0
        %1257 = vmatprep.subr.bf16.mxu0 0
        %1258 = vmatpush2.bf16.msra.mxu0 0
        %1259 = vmatprep.subr.bf16.mxu0 0
        %1260 = vmatpush2.bf16.msra.mxu0 0
        %1261 = vmatprep.subr.bf16.mxu0 0
        %1262 = vmatpush2.bf16.msra.mxu0 0
        %1263 = vmatprep.subr.bf16.mxu0 0
        %1264 = vmatpush2.bf16.msra.mxu0 0
        %1265 = vmatprep.subr.bf16.mxu0 0
        %1266 = vmatpush2.bf16.msra.mxu0 0
        %1267 = vmatprep.mubr.bf16.mxu0 0
        %1268 = vmatmul.mubr.bf16.gmra.mxu0 %v1230
        %v1269 = vpop.f32.mrf.mxu0
        %v1270 = vadd.f32 0.0, %v1269
        %v1271 = vpop.f32.mrf.mxu0
        %v1272 = vpop.f32.mrf.mxu0
        %v1273 = vpop.f32.mrf.mxu0
        %1274 = vdwg.mxu0
        %v1276 = vsel %vm625, %v1177, 0
        %v1279 = vsel %vm942, %v1181, 0
        %1281 = vmatprep.subr.bf16.mxu0 0
        %1282 = vmatpush1.bf16.msra.mxu0 0
        %1283 = vmatprep.subr.bf16.mxu0 0
        %1284 = vmatpush1.bf16.msra.mxu0 0
        %1285 = vmatprep.subr.bf16.mxu0 0
        %1286 = vmatpush1.bf16.msra.mxu0 0
        %1287 = vmatprep.subr.bf16.mxu0 0
        %1288 = vmatpush1.bf16.msra.mxu0 0
        %1289 = vmatprep.subr.bf16.mxu0 0
        %1290 = vmatpush1.bf16.msra.mxu0 0
        %1291 = vmatprep.subr.bf16.mxu0 0
        %1292 = vmatpush1.bf16.msra.mxu0 0
        %1293 = vmatprep.subr.bf16.mxu0 0
        %1294 = vmatpush1.bf16.msra.mxu0 0
        %1295 = vmatprep.subr.bf16.mxu0 0
        %1296 = vmatpush1.bf16.msra.mxu0 %v1279
        %1297 = vmatprep.subr.bf16.mxu0 0
        %1298 = vmatpush2.bf16.msra.mxu0 0
        %1299 = vmatprep.subr.bf16.mxu0 0
        %1300 = vmatpush2.bf16.msra.mxu0 0
        %1301 = vmatprep.subr.bf16.mxu0 0
        %1302 = vmatpush2.bf16.msra.mxu0 0
        %1303 = vmatprep.subr.bf16.mxu0 0
        %1304 = vmatpush2.bf16.msra.mxu0 0
        %1305 = vmatprep.subr.bf16.mxu0 0
        %1306 = vmatpush2.bf16.msra.mxu0 0
        %1307 = vmatprep.subr.bf16.mxu0 0
        %1308 = vmatpush2.bf16.msra.mxu0 0
        %1309 = vmatprep.subr.bf16.mxu0 0
        %1310 = vmatpush2.bf16.msra.mxu0 0
        %1311 = vmatprep.subr.bf16.mxu0 0
        %1312 = vmatpush2.bf16.msra.mxu0 0
        %1313 = vmatprep.mubr.bf16.mxu0 0
        %1314 = vmatmul.mubr.bf16.gmra.mxu0 %v1276
        %v1315 = vpop.f32.mrf.mxu0
        %v1316 = vadd.f32 0.0, %v1315
        %v1317 = vpop.f32.mrf.mxu0
        %v1318 = vpop.f32.mrf.mxu0
        %v1319 = vpop.f32.mrf.mxu0
        %1320 = vdwg.mxu0
        %v1322 = vsel %vm625, %v1178, 0
        %v1325 = vsel %vm942, %v1182, 0
        %1327 = vmatprep.subr.bf16.mxu0 0
        %1328 = vmatpush1.bf16.msra.mxu0 0
        %1329 = vmatprep.subr.bf16.mxu0 0
        %1330 = vmatpush1.bf16.msra.mxu0 0
        %1331 = vmatprep.subr.bf16.mxu0 0
        %1332 = vmatpush1.bf16.msra.mxu0 0
        %1333 = vmatprep.subr.bf16.mxu0 0
        %1334 = vmatpush1.bf16.msra.mxu0 0
        %1335 = vmatprep.subr.bf16.mxu0 0
        %1336 = vmatpush1.bf16.msra.mxu0 0
        %1337 = vmatprep.subr.bf16.mxu0 0
        %1338 = vmatpush1.bf16.msra.mxu0 0
        %1339 = vmatprep.subr.bf16.mxu0 0
        %1340 = vmatpush1.bf16.msra.mxu0 0
        %1341 = vmatprep.subr.bf16.mxu0 0
        %1342 = vmatpush1.bf16.msra.mxu0 %v1325
        %1343 = vmatprep.subr.bf16.mxu0 0
        %1344 = vmatpush2.bf16.msra.mxu0 0
        %1345 = vmatprep.subr.bf16.mxu0 0
        %1346 = vmatpush2.bf16.msra.mxu0 0
        %1347 = vmatprep.subr.bf16.mxu0 0
        %1348 = vmatpush2.bf16.msra.mxu0 0
        %1349 = vmatprep.subr.bf16.mxu0 0
        %1350 = vmatpush2.bf16.msra.mxu0 0
        %1351 = vmatprep.subr.bf16.mxu0 0
        %1352 = vmatpush2.bf16.msra.mxu0 0
        %1353 = vmatprep.subr.bf16.mxu0 0
        %1354 = vmatpush2.bf16.msra.mxu0 0
        %1355 = vmatprep.subr.bf16.mxu0 0
        %1356 = vmatpush2.bf16.msra.mxu0 0
        %1357 = vmatprep.subr.bf16.mxu0 0
        %1358 = vmatpush2.bf16.msra.mxu0 0
        %1359 = vmatprep.mubr.bf16.mxu0 0
        %1360 = vmatmul.mubr.bf16.gmra.mxu0 %v1322
        %v1361 = vpop.f32.mrf.mxu0
        %v1362 = vadd.f32 0.0, %v1361
        %v1363 = vpop.f32.mrf.mxu0
        %v1364 = vpop.f32.mrf.mxu0
        %v1365 = vpop.f32.mrf.mxu0
        %1366 = vdwg.mxu0
        %vm1367 = vcmask 261120
        %v1368 = vsel %vm1367, %v1224, 0.0
        %v1369 = vsel %vm1367, %v1270, 0.0
        %v1370 = vadd.f32 %v1368, %v1369
        %v1371 = vsel %vm1367, %v1316, 0.0
        %v1372 = vadd.f32 %v1370, %v1371
        %v1373 = vsel %vm1367, %v1362, 0.0
        %v1374 = vadd.f32 %v1372, %v1373
        %v1375 = vld [vmem:[%s5] sm:$0x1]
        %v1377 = vlaneseq
        %v1378 = vshrl.u32 %v1377, 7
        %v1379 = vsub.s32 0, %v1378
        %v1380 = vrot.slane %v1375, %v1379
        %v1382 = vadd.f32 %v1374, %v1380
        %v1383 = vld [vmem:[%s562] sm:$0xff]
        %v1384 = vadd.f32 %v1383, %v1382
        %v1385 = vld [vmem:[%s6] sm:$0x1]
        %v1386 = vld [vmem:[%s7] sm:$0x1]
        %v1387 = vsel %vm1367, %v1384, 0.0
        %1388 = vadd.xlane.f32.xlu0 %v1387
        %v1389 = vpop.xlane.xlu0 %1388
        %v1390 = vrcp.pop 32.0
        %v1391 = vmul.f32 %v1389, %v1390
        %v1392 = vsub.f32 %v1384, %v1391
        %v1393 = vmul.f32 %v1392, %v1392
        %v1394 = vsel %vm1367, %v1393, 0.0
        %1395 = vadd.xlane.f32.xlu0 %v1394
        %v1396 = vpop.xlane.xlu0 %1395
        %v1397 = vmul.f32 %v1396, %v1390
        %v1398 = vadd.f32 %v1397, 1e-05
        %v1399 = vrsqrt.pop %v1398
        %v1400 = vmul.f32 %v1392, %v1399
        %v1402 = vlaneseq
        %v1403 = vshrl.u32 %v1402, 7
        %v1404 = vsub.s32 0, %v1403
        %v1405 = vrot.slane %v1385, %v1404
        %v1407 = vmul.f32 %v1400, %v1405
        %v1409 = vlaneseq
        %v1410 = vshrl.u32 %v1409, 7
        %v1411 = vsub.s32 0, %v1410
        %v1412 = vrot.slane %v1386, %v1411
        %v1414 = vadd.f32 %v1407, %v1412
        %v1415 = vpack.c.bf16 %v1414, %v1414
        %v1416 = vld [vmem:[%s8] sm:$0xf]
        %v1417 = vld [vmem:[%s8 + $0x4] sm:$0xf]
        %v1418 = vld [vmem:[%s8 + $0x8] sm:$0xf]
        %v1419 = vld [vmem:[%s8 + $0xc] sm:$0xf]
        %v1420 = vld [vmem:[%s9] sm:$0x1]
        %v1422 = vlaneseq
        %v1423 = vshrl.u32 %v1422, 7
        %v1424 = vsub.s32 0, %v1423
        %v1425 = vrot.slane %v1420, %v1424
        %v1431 = vunpack.c.l.b16 %v1416
        %v1432 = vunpack.c.l.b16 %v1417
        %v1433 = vunpack.c.l.b16 %v1418
        %v1434 = vunpack.c.l.b16 %v1419
        %v1435 = vpack.c.b16 %v1432, %v1431
        %v1436 = vpack.c.b16 %v1434, %v1433
        %v1440 = vsel %vm1367, %v1415, 0
        %1442 = vmatprep.subr.bf16.mxu0 0
        %1443 = vmatpush1.bf16.msra.mxu0 0
        %1444 = vmatprep.subr.bf16.mxu0 0
        %1445 = vmatpush1.bf16.msra.mxu0 0
        %1446 = vmatprep.subr.bf16.mxu0 0
        %1447 = vmatpush1.bf16.msra.mxu0 0
        %1448 = vmatprep.subr.bf16.mxu0 0
        %1449 = vmatpush1.bf16.msra.mxu0 0
        %1450 = vmatprep.subr.bf16.mxu0 0
        %1451 = vmatpush1.bf16.msra.mxu0 0
        %1452 = vmatprep.subr.bf16.mxu0 0
        %1453 = vmatpush1.bf16.msra.mxu0 0
        %1454 = vmatprep.subr.bf16.mxu0 0
        %1455 = vmatpush1.bf16.msra.mxu0 %v1436
        %1456 = vmatprep.subr.bf16.mxu0 0
        %1457 = vmatpush1.bf16.msra.mxu0 %v1435
        %1458 = vmatprep.subr.bf16.mxu0 0
        %1459 = vmatpush2.bf16.msra.mxu0 0
        %1460 = vmatprep.subr.bf16.mxu0 0
        %1461 = vmatpush2.bf16.msra.mxu0 0
        %1462 = vmatprep.subr.bf16.mxu0 0
        %1463 = vmatpush2.bf16.msra.mxu0 0
        %1464 = vmatprep.subr.bf16.mxu0 0
        %1465 = vmatpush2.bf16.msra.mxu0 0
        %1466 = vmatprep.subr.bf16.mxu0 0
        %1467 = vmatpush2.bf16.msra.mxu0 0
        %1468 = vmatprep.subr.bf16.mxu0 0
        %1469 = vmatpush2.bf16.msra.mxu0 0
        %1470 = vmatprep.subr.bf16.mxu0 0
        %1471 = vmatpush2.bf16.msra.mxu0 0
        %1472 = vmatprep.subr.bf16.mxu0 0
        %1473 = vmatpush2.bf16.msra.mxu0 0
        %1474 = vmatprep.mubr.bf16.mxu0 0
        %1475 = vmatmul.mubr.bf16.gmra.mxu0 %v1440
        %v1476 = vpop.f32.mrf.mxu0
        %v1477 = vadd.f32 %v1425, %v1476
        %v1478 = vpop.f32.mrf.mxu0
        %v1479 = vpop.f32.mrf.mxu0
        %v1480 = vpop.f32.mrf.mxu0
        %1481 = vdwg.mxu0
        %v1482 = vmul.f32 %v1477, 0.5
        %v1483 = vrcp.pop 1.4142135
        %v1484 = vmul.f32 %v1477, %v1483
        %v1485 = verf.f32.pop %v1484
        %v1486 = vadd.f32 %v1485, 1.0
        %v1487 = vmul.f32 %v1482, %v1486
        %v1488 = vpack.c.bf16 %v1487, %v1487
        %v1489 = vld [vmem:[%s10] sm:$0xf]
        %v1490 = vld [vmem:[%s10 + $0x4] sm:$0xf]
        %v1491 = vld [vmem:[%s10 + $0x8] sm:$0xf]
        %v1492 = vld [vmem:[%s10 + $0xc] sm:$0xf]
        %v1493 = vld [vmem:[%s10 + $0x10] sm:$0xf]
        %v1494 = vld [vmem:[%s10 + $0x14] sm:$0xf]
        %v1495 = vld [vmem:[%s10 + $0x18] sm:$0xf]
        %v1496 = vld [vmem:[%s10 + $0x1c] sm:$0xf]
        %v1497 = vld [vmem:[%s10 + $0x20] sm:$0xf]
        %v1498 = vld [vmem:[%s10 + $0x24] sm:$0xf]
        %v1499 = vld [vmem:[%s10 + $0x28] sm:$0xf]
        %v1500 = vld [vmem:[%s10 + $0x2c] sm:$0xf]
        %v1501 = vld [vmem:[%s10 + $0x30] sm:$0xf]
        %v1502 = vld [vmem:[%s10 + $0x34] sm:$0xf]
        %v1503 = vld [vmem:[%s10 + $0x38] sm:$0xf]
        %v1504 = vld [vmem:[%s10 + $0x3c] sm:$0xf]
        %v1505 = vld [vmem:[%s11] sm:$0x1]
        %v1507 = vlaneseq
        %v1508 = vshrl.u32 %v1507, 7
        %v1509 = vsub.s32 0, %v1508
        %v1510 = vrot.slane %v1505, %v1509
        %v1528 = vunpack.c.l.b16 %v1489
        %v1529 = vunpack.c.l.b16 %v1490
        %v1530 = vunpack.c.l.b16 %v1491
        %v1531 = vunpack.c.l.b16 %v1492
        %v1532 = vunpack.c.l.b16 %v1493
        %v1533 = vunpack.c.l.b16 %v1494
        %v1534 = vunpack.c.l.b16 %v1495
        %v1535 = vunpack.c.l.b16 %v1496
        %v1536 = vunpack.c.l.b16 %v1497
        %v1537 = vunpack.c.l.b16 %v1498
        %v1538 = vunpack.c.l.b16 %v1499
        %v1539 = vunpack.c.l.b16 %v1500
        %v1540 = vunpack.c.l.b16 %v1501
        %v1541 = vunpack.c.l.b16 %v1502
        %v1542 = vunpack.c.l.b16 %v1503
        %v1543 = vunpack.c.l.b16 %v1504
        %v1544 = vpack.c.b16 %v1529, %v1528
        %v1545 = vpack.c.b16 %v1531, %v1530
        %v1546 = vpack.c.b16 %v1533, %v1532
        %v1547 = vpack.c.b16 %v1535, %v1534
        %v1548 = vpack.c.b16 %v1537, %v1536
        %v1549 = vpack.c.b16 %v1539, %v1538
        %v1550 = vpack.c.b16 %v1541, %v1540
        %v1551 = vpack.c.b16 %v1543, %v1542
        %1560 = vmatprep.subr.bf16.mxu0 0
        %1561 = vmatpush1.bf16.msra.mxu0 %v1551
        %1562 = vmatprep.subr.bf16.mxu0 0
        %1563 = vmatpush1.bf16.msra.mxu0 %v1550
        %1564 = vmatprep.subr.bf16.mxu0 0
        %1565 = vmatpush1.bf16.msra.mxu0 %v1549
        %1566 = vmatprep.subr.bf16.mxu0 0
        %1567 = vmatpush1.bf16.msra.mxu0 %v1548
        %1568 = vmatprep.subr.bf16.mxu0 0
        %1569 = vmatpush1.bf16.msra.mxu0 %v1547
        %1570 = vmatprep.subr.bf16.mxu0 0
        %1571 = vmatpush1.bf16.msra.mxu0 %v1546
        %1572 = vmatprep.subr.bf16.mxu0 0
        %1573 = vmatpush1.bf16.msra.mxu0 %v1545
        %1574 = vmatprep.subr.bf16.mxu0 0
        %1575 = vmatpush1.bf16.msra.mxu0 %v1544
        %1576 = vmatprep.subr.bf16.mxu0 0
        %1577 = vmatpush2.bf16.msra.mxu0 0
        %1578 = vmatprep.subr.bf16.mxu0 0
        %1579 = vmatpush2.bf16.msra.mxu0 0
        %1580 = vmatprep.subr.bf16.mxu0 0
        %1581 = vmatpush2.bf16.msra.mxu0 0
        %1582 = vmatprep.subr.bf16.mxu0 0
        %1583 = vmatpush2.bf16.msra.mxu0 0
        %1584 = vmatprep.subr.bf16.mxu0 0
        %1585 = vmatpush2.bf16.msra.mxu0 0
        %1586 = vmatprep.subr.bf16.mxu0 0
        %1587 = vmatpush2.bf16.msra.mxu0 0
        %1588 = vmatprep.subr.bf16.mxu0 0
        %1589 = vmatpush2.bf16.msra.mxu0 0
        %1590 = vmatprep.subr.bf16.mxu0 0
        %1591 = vmatpush2.bf16.msra.mxu0 0
        %1592 = vmatprep.mubr.bf16.mxu0 0
        %1593 = vmatmul.mubr.bf16.gmra.mxu0 %v1488
        %v1594 = vpop.f32.mrf.mxu0
        %v1595 = vadd.f32 %v1510, %v1594
        %v1596 = vpop.f32.mrf.mxu0
        %v1597 = vpop.f32.mrf.mxu0
        %v1598 = vpop.f32.mrf.mxu0
        %1599 = vdwg.mxu0
        %v1600 = vadd.f32 %v1414, %v1595
        %v1601 = vld [vmem:[%s12] sm:$0x1]
        %v1602 = vld [vmem:[%s13] sm:$0x1]
        %v1603 = vsel %vm1367, %v1600, 0.0
        %1604 = vadd.xlane.f32.xlu0 %v1603
        %v1605 = vpop.xlane.xlu0 %1604
        %v1606 = vmul.f32 %v1605, %v1390
        %v1607 = vsub.f32 %v1600, %v1606
        %v1608 = vmul.f32 %v1607, %v1607
        %v1609 = vsel %vm1367, %v1608, 0.0
        %1610 = vadd.xlane.f32.xlu0 %v1609
        %v1611 = vpop.xlane.xlu0 %1610
        %v1612 = vmul.f32 %v1611, %v1390
        %v1613 = vadd.f32 %v1612, 1e-05
        %v1614 = vrsqrt.pop %v1613
        %v1615 = vmul.f32 %v1607, %v1614
        %v1617 = vlaneseq
        %v1618 = vshrl.u32 %v1617, 7
        %v1619 = vsub.s32 0, %v1618
        %v1620 = vrot.slane %v1601, %v1619
        %v1622 = vmul.f32 %v1615, %v1620
        %v1624 = vlaneseq
        %v1625 = vshrl.u32 %v1624, 7
        %v1626 = vsub.s32 0, %v1625
        %v1627 = vrot.slane %v1602, %v1626
        %v1629 = vadd.f32 %v1622, %v1627
        %1630 = vst.msk [vmem:[%s593] sm:$0xff] %vm1367, %v1629
      $region84: #{nanogpt_classifier.6} parent=75 // pred_fallthru
        _
      %p1631 = scmp.lt.s32.totalorder %s30, 1
      %s1632 = scalar_select %p1631, %s30, 1
      %p1633 = scmp.lt.s32.totalorder %s31, 0
      %s1634 = scalar_select %p1633, %s31, 0
      %s1635 = sadd.s32 %s1634, %s1632
      %s1636 = smul.addr %s1635, 8
      %s1637 = scalar_lea.vmem %s14, %s1636
      // Predicated region
      $region85: #{nanogpt_classifier.6} parent=75 // pred_check
        %p1638 = pneg %p386
      $region86: #{nanogpt_classifier.6} parent=75 // pred_check_branch
        %1640 = sbr.rel (%p1638) target = $region88
      $region87: #{nanogpt_classifier.6} parent=75 // pred_region
        _
      $region88: #{nanogpt_classifier.6} parent=75 // pred_fallthru
        _
    $region76: #{nanogpt_classifier.6} parent=5 // pred_fallthru
      _
    %p1641 = scmp.le.s32.totalorder 2, %s20
    // Predicated region
    $region89: #{nanogpt_classifier.6} parent=5 // pred_check
      %p1642 = pneg %p1641
    $region90: #{nanogpt_classifier.6} parent=5 // pred_check_branch
      %1644 = sbr.rel (%p1642) target = $region92
    $region91: #{nanogpt_classifier.6} parent=5 // pred_region
      %s1645 = ssub.s32 %s20, 2
      // Predicated region
      $region93: #{nanogpt_classifier.6} parent=91 // pred_check
        %p1646 = pneg %p392
      $region94: #{nanogpt_classifier.6} parent=91 // pred_check_branch
        %1648 = sbr.rel (%p1646) target = $region96
      $region95: #{nanogpt_classifier.6} parent=91 // pred_region
        %p1649 = scmp.lt.s32.totalorder %s33, 1
        %s1650 = scalar_select %p1649, %s33, 1
        %p1651 = scmp.lt.s32.totalorder %s34, 0
        %s1652 = scalar_select %p1651, %s34, 0
        %s1653 = sadd.s32 %s1652, %s1650
        %s1654 = smul.addr %s1653, 8
        %s1655 = scalar_lea.vmem %s14, %s1654
      $region96: #{nanogpt_classifier.6} parent=91 // pred_fallthru
        _
    $region92: #{nanogpt_classifier.6} parent=5 // pred_fallthru
      _
  $region6: #{nanogpt_classifier.6} parent=0 // loop_footer
    %s24 = sadd.s32 1, %s20
  $region7: #{nanogpt_classifier.6} parent=0 // loop_footer_branch
    %19 = sbr.rel target = $region3
  $region8: #{nanogpt_classifier.6} parent=0 // loop_exit
    _

</llo_original>
